<compile_context>
chip_gen: v6e
topology: v6e:2x2x1
jax: 0.10.0
libtpu: 0.0.40
codegen_flags: <defaults>
</compile_context>

<pallas_src>
import jax
import jax.numpy as jnp
from jax.experimental import pallas as pl
from jax.experimental.pallas import tpu as pltpu


def _round_up(x, m):
    return ((x + m - 1) // m) * m


def ff_kernel(x_ref, w1_ref, b1_ref, w2_ref, b2_ref, w3_ref, b3_ref, o_ref):
    # layer 1: [bm, K] @ [K, 1024] (bf16 MXU, f32 acc) + b1 -> ReLU
    h1 = jnp.dot(x_ref[...], w1_ref[...], preferred_element_type=jnp.float32)
    h1 = jnp.maximum(h1 + b1_ref[...], 0.0)
    # dropout (p=0.2): identity in eval mode
    h1 = h1.astype(w2_ref.dtype)

    # layer 2: [bm, 1024] @ [1024, 256] + b2 -> ReLU
    h2 = jnp.dot(h1, w2_ref[...], preferred_element_type=jnp.float32)
    h2 = jnp.maximum(h2 + b2_ref[...], 0.0)
    # dropout (p=0.2): identity in eval mode
    h2 = h2.astype(w3_ref.dtype)

    # layer 3: [bm, 256] @ [256, G_pad] + b3  (lane-dense, padded output)
    out = jnp.dot(h2, w3_ref[...], preferred_element_type=jnp.float32) + b3_ref[...]
    o_ref[...] = out.astype(o_ref.dtype)


def ff_forward(x, w1, b1, w2, b2, w3, b3, *, bm=None,
               compute_dtype=jnp.bfloat16, out_dtype=None):
    """x: [B, n_in]; weights stored [in, out]; biases [out] or [1, out]."""
    B, n_in = x.shape
    H1 = w1.shape[1]          # 1024
    H2 = w2.shape[1]          # 256
    G = w3.shape[1]           # genre_output
    if out_dtype is None:
        out_dtype = x.dtype

    # Batch tile: multiple of 8, capped so intermediates stay small and a
    # large batch still yields a multi-step (megacore-splittable) grid.
    if bm is None:
        bm = min(256, _round_up(B, 8))
    bm = max(8, _round_up(bm, 8))

    # Pad batch / K / output lanes to clean TPU tiling.
    B_pad = _round_up(B, bm)
    K_pad = _round_up(n_in, 128)
    G_pad = _round_up(G, 128)

    cdt = compute_dtype
    x_p = jnp.zeros((B_pad, K_pad), cdt).at[:B, :n_in].set(x.astype(cdt))
    w1_p = jnp.zeros((K_pad, H1), cdt).at[:n_in, :].set(w1.astype(cdt))
    w2_c = w2.astype(cdt)
    w3_p = jnp.zeros((H2, G_pad), cdt).at[:, :G].set(w3.astype(cdt))
    b1_c = b1.astype(jnp.float32).reshape(1, H1)
    b2_c = b2.astype(jnp.float32).reshape(1, H2)
    b3_p = jnp.zeros((1, G_pad), jnp.float32).at[:, :G].set(
        b3.astype(jnp.float32).reshape(1, G))

    grid = (B_pad // bm,)

    itemsize_c = jnp.dtype(cdt).itemsize
    itemsize_o = jnp.dtype(out_dtype).itemsize

    # Advisory cost estimate for the XLA scheduler.
    flops = 2 * B_pad * (K_pad * H1 + H1 * H2 + H2 * G_pad)
    bytes_accessed = (
        (B_pad * K_pad + K_pad * H1 + H1 * H2 + H2 * G_pad) * itemsize_c
        + (H1 + H2 + G_pad) * 4
        + B_pad * G_pad * itemsize_o)
    cost = pl.CostEstimate(flops=flops, transcendentals=0,
                           bytes_accessed=bytes_accessed)

    # VMEM budget: double-buffered streaming blocks + resident weights/biases
    # + f32 intermediates, with generous headroom; clamp to physical-ish cap.
    vmem_bytes = (
        2 * bm * K_pad * itemsize_c                       # x tile (double-buffered)
        + 2 * bm * G_pad * itemsize_o                     # out tile (double-buffered)
        + (K_pad * H1 + H1 * H2 + H2 * G_pad) * itemsize_c  # weights (resident)
        + (H1 + H2 + G_pad) * 4                           # biases
        + bm * (H1 + H2 + G_pad) * 4                      # f32 intermediates
        + bm * (H1 + H2) * itemsize_c)                    # bf16 re-casts
    vmem_limit = min(100 << 20, max(8 << 20, int(vmem_bytes * 2) + (2 << 20)))

    out = pl.pallas_call(
        ff_kernel,
        out_shape=jax.ShapeDtypeStruct((B_pad, G_pad), out_dtype),
        grid_spec=pltpu.PrefetchScalarGridSpec(
            num_scalar_prefetch=0,
            grid=grid,
            in_specs=[
                pl.BlockSpec((bm, K_pad), lambda i: (i, 0)),   # x tile (streams)
                pl.BlockSpec((K_pad, H1), lambda i: (0, 0)),   # W1 (resident)
                pl.BlockSpec((1, H1),     lambda i: (0, 0)),   # b1
                pl.BlockSpec((H1, H2),    lambda i: (0, 0)),   # W2 (resident)
                pl.BlockSpec((1, H2),     lambda i: (0, 0)),   # b2
                pl.BlockSpec((H2, G_pad), lambda i: (0, 0)),   # W3 (padded, resident)
                pl.BlockSpec((1, G_pad),  lambda i: (0, 0)),   # b3 (padded)
            ],
            out_specs=pl.BlockSpec((bm, G_pad), lambda i: (i, 0)),
        ),
        compiler_params=pltpu.CompilerParams(
            dimension_semantics=("parallel",),
            vmem_limit_bytes=vmem_limit,
        ),
        cost_estimate=cost,
    )(x_p, w1_p, b1_c, w2_c, b2_c, w3_p, b3_p)

    return out[:B, :G]


def init_params(key, n_input, genre_output=8, dtype=jnp.float32):
    """Deterministic init mimicking nn.Linear default (U(-1/sqrt(fan_in), +))."""
    dims = [(n_input, 1024), (1024, 256), (256, genre_output)]
    params = []
    for (fan_in, fan_out) in dims:
        key, kw, kb = jax.random.split(key, 3)
        bound = 1.0 / (fan_in ** 0.5)
        # Stored as [in, out] (transpose of PyTorch's [out, in]) so kernel does x @ W.
        w = jax.random.uniform(kw, (fan_in, fan_out), dtype, -bound, bound)
        b = jax.random.uniform(kb, (1, fan_out), dtype, -bound, bound)
        params += [w, b]
    return params


if __name__ == "__main__":
    key = jax.random.PRNGKey(0)
    k_x, k_p = jax.random.split(key)

    batch, n_input, genre_output = 8, 32, 8
    x = jax.random.normal(k_x, (batch, n_input), jnp.float32)
    w1, b1, w2, b2, w3, b3 = init_params(k_p, n_input, genre_output)

    out = ff_forward(x, w1, b1, w2, b2, w3, b3)
    out = jax.block_until_ready(out)

    # Plain-JAX reference following the same bf16-compute / f32-accumulate path
    # (eval-mode dropout == identity).
    bf = jnp.bfloat16
    h1 = jnp.maximum(
        jnp.dot(x.astype(bf), w1.astype(bf), preferred_element_type=jnp.float32) + b1, 0.0)
    h2 = jnp.maximum(
        jnp.dot(h1.astype(bf), w2.astype(bf), preferred_element_type=jnp.float32) + b2, 0.0)
    ref = jnp.dot(h2.astype(bf), w3.astype(bf), preferred_element_type=jnp.float32) + b3

    assert out.shape == (batch, genre_output), out.shape
    assert jnp.allclose(out, ref, atol=1e-2, rtol=1e-2), "mismatch vs reference"
    print("KERNEL_OK")
</pallas_src>

<mosaic_0001>
module attributes {stable_mosaic.version = 11 : i64} {
  func.func @ff_kernel(%arg0: i32, %arg1: memref<8x128xbf16, #tpu.memory_space<vmem>>, %arg2: memref<128x1024xbf16, #tpu.memory_space<vmem>>, %arg3: memref<1x1024xf32, #tpu.memory_space<vmem>>, %arg4: memref<1024x256xbf16, #tpu.memory_space<vmem>>, %arg5: memref<1x256xf32, #tpu.memory_space<vmem>>, %arg6: memref<256x128xbf16, #tpu.memory_space<vmem>>, %arg7: memref<1x128xf32, #tpu.memory_space<vmem>>, %arg8: memref<8x128xf32, #tpu.memory_space<vmem>>) attributes {dimension_semantics = [#tpu.dimension_semantics<parallel>], iteration_bounds = array<i64: 1>, scalar_prefetch = 0 : i64, scratch_operands = 0 : i64, tpu.core_type = #tpu.core_type<tc>, window_params = [{transform_indices = @transform_0, window_bounds = array<i64: 8, 128>}, {pipeline_mode = #tpu.pipeline_mode<synchronous>, transform_indices = @transform_1, window_bounds = array<i64: 128, 1024>}, {pipeline_mode = #tpu.pipeline_mode<synchronous>, transform_indices = @transform_2, window_bounds = array<i64: 1, 1024>}, {pipeline_mode = #tpu.pipeline_mode<synchronous>, transform_indices = @transform_3, window_bounds = array<i64: 1024, 256>}, {pipeline_mode = #tpu.pipeline_mode<synchronous>, transform_indices = @transform_4, window_bounds = array<i64: 1, 256>}, {pipeline_mode = #tpu.pipeline_mode<synchronous>, transform_indices = @transform_5, window_bounds = array<i64: 256, 128>}, {pipeline_mode = #tpu.pipeline_mode<synchronous>, transform_indices = @transform_6, window_bounds = array<i64: 1, 128>}, {transform_indices = @transform_7, window_bounds = array<i64: 8, 128>}]} {
    %c0 = arith.constant 0 : index
    %c0_0 = arith.constant 0 : index
    %0 = vector.load %arg1[%c0, %c0_0] : memref<8x128xbf16, #tpu.memory_space<vmem>>, vector<8x128xbf16>
    %c0_1 = arith.constant 0 : index
    %c0_2 = arith.constant 0 : index
    %1 = vector.load %arg2[%c0_1, %c0_2] : memref<128x1024xbf16, #tpu.memory_space<vmem>>, vector<128x1024xbf16>
    %cst = arith.constant dense<0.000000e+00> : vector<8x1024xf32>
    %2 = tpu.matmul %0, %1, %cst {dimension_numbers = #tpu.dot_dimension_numbers<[1], [0], [0], [1], [0, 0, 1, 1], [], []>} : vector<8x128xbf16>, vector<128x1024xbf16>, vector<8x1024xf32> -> vector<8x1024xf32>
    %c0_3 = arith.constant 0 : index
    %c0_4 = arith.constant 0 : index
    %3 = vector.load %arg3[%c0_3, %c0_4] : memref<1x1024xf32, #tpu.memory_space<vmem>>, vector<1x1024xf32>
    %4 = vector.broadcast %3 : vector<1x1024xf32> to vector<8x1024xf32>
    %5 = arith.addf %2, %4 : vector<8x1024xf32>
    %cst_5 = arith.constant 0.000000e+00 : f32
    %6 = vector.broadcast %cst_5 : f32 to vector<8x1024xf32>
    %7 = arith.maximumf %5, %6 : vector<8x1024xf32>
    %8 = arith.truncf %7 : vector<8x1024xf32> to vector<8x1024xbf16>
    %c0_6 = arith.constant 0 : index
    %c0_7 = arith.constant 0 : index
    %9 = vector.load %arg4[%c0_6, %c0_7] : memref<1024x256xbf16, #tpu.memory_space<vmem>>, vector<1024x256xbf16>
    %cst_8 = arith.constant dense<0.000000e+00> : vector<8x256xf32>
    %10 = tpu.matmul %8, %9, %cst_8 {dimension_numbers = #tpu.dot_dimension_numbers<[1], [0], [0], [1], [0, 0, 1, 1], [], []>} : vector<8x1024xbf16>, vector<1024x256xbf16>, vector<8x256xf32> -> vector<8x256xf32>
    %c0_9 = arith.constant 0 : index
    %c0_10 = arith.constant 0 : index
    %11 = vector.load %arg5[%c0_9, %c0_10] : memref<1x256xf32, #tpu.memory_space<vmem>>, vector<1x256xf32>
    %12 = vector.broadcast %11 : vector<1x256xf32> to vector<8x256xf32>
    %13 = arith.addf %10, %12 : vector<8x256xf32>
    %cst_11 = arith.constant 0.000000e+00 : f32
    %14 = vector.broadcast %cst_11 : f32 to vector<8x256xf32>
    %15 = arith.maximumf %13, %14 : vector<8x256xf32>
    %16 = arith.truncf %15 : vector<8x256xf32> to vector<8x256xbf16>
    %c0_12 = arith.constant 0 : index
    %c0_13 = arith.constant 0 : index
    %17 = vector.load %arg6[%c0_12, %c0_13] : memref<256x128xbf16, #tpu.memory_space<vmem>>, vector<256x128xbf16>
    %cst_14 = arith.constant dense<0.000000e+00> : vector<8x128xf32>
    %18 = tpu.matmul %16, %17, %cst_14 {dimension_numbers = #tpu.dot_dimension_numbers<[1], [0], [0], [1], [0, 0, 1, 1], [], []>} : vector<8x256xbf16>, vector<256x128xbf16>, vector<8x128xf32> -> vector<8x128xf32>
    %c0_15 = arith.constant 0 : index
    %c0_16 = arith.constant 0 : index
    %19 = vector.load %arg7[%c0_15, %c0_16] : memref<1x128xf32, #tpu.memory_space<vmem>>, vector<1x128xf32>
    %20 = vector.broadcast %19 : vector<1x128xf32> to vector<8x128xf32>
    %21 = arith.addf %18, %20 : vector<8x128xf32>
    %c0_17 = arith.constant 0 : index
    %c0_18 = arith.constant 0 : index
    %22 = vector.load %arg8[%c0_17, %c0_18] : memref<8x128xf32, #tpu.memory_space<vmem>>, vector<8x128xf32>
    tpu.vector_store %arg8[%c0_17, %c0_18], %21 {strides = array<i32>} : memref<8x128xf32, #tpu.memory_space<vmem>>, vector<8x128xf32>,
    return
  }
  func.func @transform_0(%arg0: i32) -> (i32, i32) {
    %c0_i32 = arith.constant 0 : i32
    %c0_i32_0 = arith.constant 0 : i32
    return %arg0, %c0_i32 : i32, i32
  }
  func.func @transform_1(%arg0: i32) -> (i32, i32) {
    %c0_i32 = arith.constant 0 : i32
    %c0_i32_0 = arith.constant 0 : i32
    %c0_i32_1 = arith.constant 0 : i32
    return %c0_i32, %c0_i32_0 : i32, i32
  }
  func.func @transform_2(%arg0: i32) -> (i32, i32) {
    %c0_i32 = arith.constant 0 : i32
    %c0_i32_0 = arith.constant 0 : i32
    %c0_i32_1 = arith.constant 0 : i32
    return %c0_i32, %c0_i32_0 : i32, i32
  }
  func.func @transform_3(%arg0: i32) -> (i32, i32) {
    %c0_i32 = arith.constant 0 : i32
    %c0_i32_0 = arith.constant 0 : i32
    %c0_i32_1 = arith.constant 0 : i32
    return %c0_i32, %c0_i32_0 : i32, i32
  }
  func.func @transform_4(%arg0: i32) -> (i32, i32) {
    %c0_i32 = arith.constant 0 : i32
    %c0_i32_0 = arith.constant 0 : i32
    %c0_i32_1 = arith.constant 0 : i32
    return %c0_i32, %c0_i32_0 : i32, i32
  }
  func.func @transform_5(%arg0: i32) -> (i32, i32) {
    %c0_i32 = arith.constant 0 : i32
    %c0_i32_0 = arith.constant 0 : i32
    %c0_i32_1 = arith.constant 0 : i32
    return %c0_i32, %c0_i32_0 : i32, i32
  }
  func.func @transform_6(%arg0: i32) -> (i32, i32) {
    %c0_i32 = arith.constant 0 : i32
    %c0_i32_0 = arith.constant 0 : i32
    %c0_i32_1 = arith.constant 0 : i32
    return %c0_i32, %c0_i32_0 : i32, i32
  }
  func.func @transform_7(%arg0: i32) -> (i32, i32) {
    %c0_i32 = arith.constant 0 : i32
    %c0_i32_0 = arith.constant 0 : i32
    return %arg0, %c0_i32 : i32, i32
  }
}

</mosaic_0001>

<llo_original>
// kernel: tpu_custom_call.1
$region0: #{tpu_custom_call.1}
  #allocation0 [shape = 'u32[]', space=smem, size = 0x4, offset = 0x4, fixed_abs, tag = 'smem constant byte address 0x4 - core index']
  #allocation1 [shape = 'u32[144,128]{1,0:T(1,128)}', space=vmem, size = 0x12000, scoped, tag = 'internal scratch']
  %s0 = inlined_call_operand.hbm [shape: bf16[8,128], index: 0, kind: input, shape index: {}]
  %s1 = inlined_call_operand.hbm [shape: bf16[128,1024], index: 1, kind: input, shape index: {}]
  %s2 = inlined_call_operand.hbm [shape: f32[1,1024], index: 2, kind: input, shape index: {}]
  %s3 = inlined_call_operand.hbm [shape: bf16[1024,256], index: 3, kind: input, shape index: {}]
  %s4 = inlined_call_operand.vmem [shape: f32[1,256], index: 4, kind: input, shape index: {}]
  %s5 = inlined_call_operand.hbm [shape: bf16[256,128], index: 5, kind: input, shape index: {}]
  %s6 = inlined_call_operand.vmem [shape: f32[1,128], index: 6, kind: input, shape index: {}]
  %s7 = inlined_call_operand.hbm [shape: f32[8,128], index: 7, kind: output, shape index: {}]
  %s8 = sld [smem:[#allocation0]]
  $region58: #{tpu_custom_call.1} parent=0
    _
  %s10 = ssub.s32 1, %s8
  %s11 = scalar_select 0, %s10, %s8
  $region1: #{tpu_custom_call.1} parent=0
    #allocation2 [shape = 'u8[2048]{0}', space=vmem, size = 0x800, scoped, tag = 'input window, operand 0, single buffered']
    #allocation3 [shape = 's32[1]{0}', space=sflag, size = 0x4, scoped, tag = 'scoped memory for tpu_custom_call.1']
    #allocation4 [shape = 's32[1]{0}', space=sflag, size = 0x4, scoped, tag = 'scoped memory for tpu_custom_call.1']
    #allocation5 [shape = 'u8[262144]{0}', space=vmem, size = 0x40000, scoped, tag = 'input window, operand 1, single buffered']
    #allocation6 [shape = 's32[1]{0}', space=sflag, size = 0x4, scoped, tag = 'scoped memory for tpu_custom_call.1']
    #allocation7 [shape = 'u8[4096]{0}', space=vmem, size = 0x1000, scoped, tag = 'input window, operand 2, single buffered']
    #allocation8 [shape = 'u8[524288]{0}', space=vmem, size = 0x80000, scoped, tag = 'input window, operand 3, single buffered']
    #allocation9 [shape = 's32[1]{0}', space=sflag, size = 0x4, scoped, tag = 'scoped memory for tpu_custom_call.1']
    #allocation10 [shape = 'u8[65536]{0}', space=vmem, size = 0x10000, scoped, tag = 'input window, operand 5, single buffered']
    #allocation11 [shape = 'u8[4096]{0}', space=vmem, size = 0x1000, scoped, tag = 'output window, operand 0, single buffered']
    %12 = vsyncpa [#allocation3], 0
    %13 = vsyncpa [#allocation6], 0
    %14 = vsyncpa [#allocation9], 0
    %15 = vsyncpa [#allocation4], 0
    // Predicated region
    $region2: #{tpu_custom_call.1} parent=1 // pred_check
      _
    $region3: #{tpu_custom_call.1} parent=1 // pred_check_branch
      %17 = sbr.rel (0) target = $region5
    $region4: #{tpu_custom_call.1} parent=1 // pred_region
      %s19 = ssub.s32 64, 64
      %20 = vsyncadd [#allocation3], %s19
      %s22 = sshll.u32 [#allocation2], 4
      %s23 = int_to_ptr.vmem [resolvable:$true] %s22
      %25 = dma.hbm_to_vmem [thread:$0]  %s0, 64, %s23, [#allocation3]
    $region5: #{tpu_custom_call.1} parent=1 // pred_fallthru
      _
    // Predicated region
    $region6: #{tpu_custom_call.1} parent=1 // pred_check
      _
    $region7: #{tpu_custom_call.1} parent=1 // pred_check_branch
      %27 = sbr.rel (0) target = $region9
    $region8: #{tpu_custom_call.1} parent=1 // pred_region
      %s29 = ssub.s32 8192, 8192
      %30 = vsyncadd [#allocation6], %s29
      %s31 = sshll.u32 [#allocation5], 4
      %s32 = int_to_ptr.vmem [resolvable:$true] %s31
      %37 = dma.hbm_to_vmem [thread:$0]  %s1, 8192, %s32, [#allocation6], 512, 512, 32
    $region9: #{tpu_custom_call.1} parent=1 // pred_fallthru
      _
    // Predicated region
    $region10: #{tpu_custom_call.1} parent=1 // pred_check
      _
    $region11: #{tpu_custom_call.1} parent=1 // pred_check_branch
      %39 = sbr.rel (0) target = $region13
    $region12: #{tpu_custom_call.1} parent=1 // pred_region
      %s41 = ssub.s32 128, 128
      %42 = vsyncadd [#allocation6], %s41
      %s44 = sshll.u32 [#allocation7], 4
      %s45 = int_to_ptr.vmem [resolvable:$true] %s44
      %47 = dma.hbm_to_vmem [thread:$0]  %s2, 128, %s45, [#allocation6]
    $region13: #{tpu_custom_call.1} parent=1 // pred_fallthru
      _
    // Predicated region
    $region14: #{tpu_custom_call.1} parent=1 // pred_check
      _
    $region15: #{tpu_custom_call.1} parent=1 // pred_check_branch
      %49 = sbr.rel (0) target = $region17
    $region16: #{tpu_custom_call.1} parent=1 // pred_region
      %s51 = ssub.s32 16384, 16384
      %52 = vsyncadd [#allocation9], %s51
      %s53 = sshll.u32 [#allocation8], 4
      %s54 = int_to_ptr.vmem [resolvable:$true] %s53
      %59 = dma.hbm_to_vmem [thread:$0]  %s3, 16384, %s54, [#allocation9], 128, 128, 8
    $region17: #{tpu_custom_call.1} parent=1 // pred_fallthru
      _
    // Predicated region
    $region18: #{tpu_custom_call.1} parent=1 // pred_check
      _
    $region19: #{tpu_custom_call.1} parent=1 // pred_check_branch
      %61 = sbr.rel (0) target = $region21
    $region20: #{tpu_custom_call.1} parent=1 // pred_region
      _
    $region21: #{tpu_custom_call.1} parent=1 // pred_fallthru
      _
    // Predicated region
    $region22: #{tpu_custom_call.1} parent=1 // pred_check
      _
    $region23: #{tpu_custom_call.1} parent=1 // pred_check_branch
      %63 = sbr.rel (0) target = $region25
    $region24: #{tpu_custom_call.1} parent=1 // pred_region
      %s65 = ssub.s32 2048, 2048
      %66 = vsyncadd [#allocation9], %s65
      %s67 = sshll.u32 [#allocation10], 4
      %s68 = int_to_ptr.vmem [resolvable:$true] %s67
      %73 = dma.hbm_to_vmem [thread:$0]  %s5, 2048, %s68, [#allocation9], 64, 64, 4
    $region25: #{tpu_custom_call.1} parent=1 // pred_fallthru
      _
    // Predicated region
    $region26: #{tpu_custom_call.1} parent=1 // pred_check
      _
    $region27: #{tpu_custom_call.1} parent=1 // pred_check_branch
      %75 = sbr.rel (0) target = $region29
    $region28: #{tpu_custom_call.1} parent=1 // pred_region
      _
    $region29: #{tpu_custom_call.1} parent=1 // pred_fallthru
      _
    // Predicated region
    $region30: #{tpu_custom_call.1} parent=1 // pred_check
      _
    $region31: #{tpu_custom_call.1} parent=1 // pred_check_branch
      %77 = sbr.rel (0) target = $region33
    $region32: #{tpu_custom_call.1} parent=1 // pred_region
      %78 = dma.done [#allocation3], 64
    $region33: #{tpu_custom_call.1} parent=1 // pred_fallthru
      _
    // Predicated region
    $region34: #{tpu_custom_call.1} parent=1 // pred_check
      _
    $region35: #{tpu_custom_call.1} parent=1 // pred_check_branch
      %80 = sbr.rel (0) target = $region37
    $region36: #{tpu_custom_call.1} parent=1 // pred_region
      %81 = dma.done [#allocation6], 8192
    $region37: #{tpu_custom_call.1} parent=1 // pred_fallthru
      _
    // Predicated region
    $region38: #{tpu_custom_call.1} parent=1 // pred_check
      _
    $region39: #{tpu_custom_call.1} parent=1 // pred_check_branch
      %83 = sbr.rel (0) target = $region41
    $region40: #{tpu_custom_call.1} parent=1 // pred_region
      %84 = dma.done [#allocation6], 128
    $region41: #{tpu_custom_call.1} parent=1 // pred_fallthru
      _
    // Predicated region
    $region42: #{tpu_custom_call.1} parent=1 // pred_check
      _
    $region43: #{tpu_custom_call.1} parent=1 // pred_check_branch
      %86 = sbr.rel (0) target = $region45
    $region44: #{tpu_custom_call.1} parent=1 // pred_region
      %87 = dma.done [#allocation9], 16384
    $region45: #{tpu_custom_call.1} parent=1 // pred_fallthru
      _
    // Predicated region
    $region46: #{tpu_custom_call.1} parent=1 // pred_check
      _
    $region47: #{tpu_custom_call.1} parent=1 // pred_check_branch
      %89 = sbr.rel (0) target = $region49
    $region48: #{tpu_custom_call.1} parent=1 // pred_region
      %90 = dma.done [#allocation9], 2048
    $region49: #{tpu_custom_call.1} parent=1 // pred_fallthru
      _
    %v92 = vld [vmem:[#allocation2] sm:$0xf]
    %v93 = vld [vmem:[#allocation5] sm:$0xff]
    %v94 = vld [vmem:[#allocation5 + $0x8] sm:$0xff]
    %v95 = vld [vmem:[#allocation5 + $0x10] sm:$0xff]
    %v96 = vld [vmem:[#allocation5 + $0x18] sm:$0xff]
    %v97 = vld [vmem:[#allocation5 + $0x20] sm:$0xff]
    %v98 = vld [vmem:[#allocation5 + $0x28] sm:$0xff]
    %v99 = vld [vmem:[#allocation5 + $0x30] sm:$0xff]
    %v100 = vld [vmem:[#allocation5 + $0x38] sm:$0xff]
    %v101 = vld [vmem:[#allocation5 + $0x40] sm:$0xff]
    %v102 = vld [vmem:[#allocation5 + $0x48] sm:$0xff]
    %v103 = vld [vmem:[#allocation5 + $0x50] sm:$0xff]
    %v104 = vld [vmem:[#allocation5 + $0x58] sm:$0xff]
    %v105 = vld [vmem:[#allocation5 + $0x60] sm:$0xff]
    %v106 = vld [vmem:[#allocation5 + $0x68] sm:$0xff]
    %v107 = vld [vmem:[#allocation5 + $0x70] sm:$0xff]
    %v108 = vld [vmem:[#allocation5 + $0x78] sm:$0xff]
    %v109 = vld [vmem:[#allocation5 + $0x80] sm:$0xff]
    %v110 = vld [vmem:[#allocation5 + $0x88] sm:$0xff]
    %v111 = vld [vmem:[#allocation5 + $0x90] sm:$0xff]
    %v112 = vld [vmem:[#allocation5 + $0x98] sm:$0xff]
    %v113 = vld [vmem:[#allocation5 + $0xa0] sm:$0xff]
    %v114 = vld [vmem:[#allocation5 + $0xa8] sm:$0xff]
    %v115 = vld [vmem:[#allocation5 + $0xb0] sm:$0xff]
    %v116 = vld [vmem:[#allocation5 + $0xb8] sm:$0xff]
    %v117 = vld [vmem:[#allocation5 + $0xc0] sm:$0xff]
    %v118 = vld [vmem:[#allocation5 + $0xc8] sm:$0xff]
    %v119 = vld [vmem:[#allocation5 + $0xd0] sm:$0xff]
    %v120 = vld [vmem:[#allocation5 + $0xd8] sm:$0xff]
    %v121 = vld [vmem:[#allocation5 + $0xe0] sm:$0xff]
    %v122 = vld [vmem:[#allocation5 + $0xe8] sm:$0xff]
    %v123 = vld [vmem:[#allocation5 + $0xf0] sm:$0xff]
    %v124 = vld [vmem:[#allocation5 + $0xf8] sm:$0xff]
    %v125 = vld [vmem:[#allocation5 + $0x100] sm:$0xff]
    %v126 = vld [vmem:[#allocation5 + $0x108] sm:$0xff]
    %v127 = vld [vmem:[#allocation5 + $0x110] sm:$0xff]
    %v128 = vld [vmem:[#allocation5 + $0x118] sm:$0xff]
    %v129 = vld [vmem:[#allocation5 + $0x120] sm:$0xff]
    %v130 = vld [vmem:[#allocation5 + $0x128] sm:$0xff]
    %v131 = vld [vmem:[#allocation5 + $0x130] sm:$0xff]
    %v132 = vld [vmem:[#allocation5 + $0x138] sm:$0xff]
    %v133 = vld [vmem:[#allocation5 + $0x140] sm:$0xff]
    %v134 = vld [vmem:[#allocation5 + $0x148] sm:$0xff]
    %v135 = vld [vmem:[#allocation5 + $0x150] sm:$0xff]
    %v136 = vld [vmem:[#allocation5 + $0x158] sm:$0xff]
    %v137 = vld [vmem:[#allocation5 + $0x160] sm:$0xff]
    %v138 = vld [vmem:[#allocation5 + $0x168] sm:$0xff]
    %v139 = vld [vmem:[#allocation5 + $0x170] sm:$0xff]
    %v140 = vld [vmem:[#allocation5 + $0x178] sm:$0xff]
    %v141 = vld [vmem:[#allocation5 + $0x180] sm:$0xff]
    %v142 = vld [vmem:[#allocation5 + $0x188] sm:$0xff]
    %v143 = vld [vmem:[#allocation5 + $0x190] sm:$0xff]
    %v144 = vld [vmem:[#allocation5 + $0x198] sm:$0xff]
    %v145 = vld [vmem:[#allocation5 + $0x1a0] sm:$0xff]
    %v146 = vld [vmem:[#allocation5 + $0x1a8] sm:$0xff]
    %v147 = vld [vmem:[#allocation5 + $0x1b0] sm:$0xff]
    %v148 = vld [vmem:[#allocation5 + $0x1b8] sm:$0xff]
    %v149 = vld [vmem:[#allocation5 + $0x1c0] sm:$0xff]
    %v150 = vld [vmem:[#allocation5 + $0x1c8] sm:$0xff]
    %v151 = vld [vmem:[#allocation5 + $0x1d0] sm:$0xff]
    %v152 = vld [vmem:[#allocation5 + $0x1d8] sm:$0xff]
    %v153 = vld [vmem:[#allocation5 + $0x1e0] sm:$0xff]
    %v154 = vld [vmem:[#allocation5 + $0x1e8] sm:$0xff]
    %v155 = vld [vmem:[#allocation5 + $0x1f0] sm:$0xff]
    %v156 = vld [vmem:[#allocation5 + $0x1f8] sm:$0xff]
    %v157 = vld [vmem:[#allocation7] sm:$0xff]
    %v159 = vlaneseq
    %v160 = vshrl.u32 %v159, 7
    %v161 = vsub.s32 0, %v160
    %v162 = vrot.slane %v157, %v161
    %v163 = vlaneseq
    %v164 = vshrl.u32 %v163, 7
    %v165 = vsub.s32 1, %v164
    %v166 = vrot.slane %v157, %v165
    %v167 = vlaneseq
    %v168 = vshrl.u32 %v167, 7
    %v169 = vsub.s32 2, %v168
    %v170 = vrot.slane %v157, %v169
    %v171 = vlaneseq
    %v172 = vshrl.u32 %v171, 7
    %v173 = vsub.s32 3, %v172
    %v174 = vrot.slane %v157, %v173
    %v175 = vlaneseq
    %v176 = vshrl.u32 %v175, 7
    %v177 = vsub.s32 4, %v176
    %v178 = vrot.slane %v157, %v177
    %v179 = vlaneseq
    %v180 = vshrl.u32 %v179, 7
    %v181 = vsub.s32 5, %v180
    %v182 = vrot.slane %v157, %v181
    %v183 = vlaneseq
    %v184 = vshrl.u32 %v183, 7
    %v185 = vsub.s32 6, %v184
    %v186 = vrot.slane %v157, %v185
    %v187 = vlaneseq
    %v188 = vshrl.u32 %v187, 7
    %v189 = vsub.s32 7, %v188
    %v190 = vrot.slane %v157, %v189
    %v263 = vunpack.c.l.b16 %v93
    %v264 = vunpack.c.h.b16 %v93
    %v265 = vunpack.c.l.b16 %v94
    %v266 = vunpack.c.h.b16 %v94
    %v267 = vunpack.c.l.b16 %v95
    %v268 = vunpack.c.h.b16 %v95
    %v269 = vunpack.c.l.b16 %v96
    %v270 = vunpack.c.h.b16 %v96
    %v271 = vunpack.c.l.b16 %v97
    %v272 = vunpack.c.h.b16 %v97
    %v273 = vunpack.c.l.b16 %v98
    %v274 = vunpack.c.h.b16 %v98
    %v275 = vunpack.c.l.b16 %v99
    %v276 = vunpack.c.h.b16 %v99
    %v277 = vunpack.c.l.b16 %v100
    %v278 = vunpack.c.h.b16 %v100
    %v279 = vunpack.c.l.b16 %v101
    %v280 = vunpack.c.h.b16 %v101
    %v281 = vunpack.c.l.b16 %v102
    %v282 = vunpack.c.h.b16 %v102
    %v283 = vunpack.c.l.b16 %v103
    %v284 = vunpack.c.h.b16 %v103
    %v285 = vunpack.c.l.b16 %v104
    %v286 = vunpack.c.h.b16 %v104
    %v287 = vunpack.c.l.b16 %v105
    %v288 = vunpack.c.h.b16 %v105
    %v289 = vunpack.c.l.b16 %v106
    %v290 = vunpack.c.h.b16 %v106
    %v291 = vunpack.c.l.b16 %v107
    %v292 = vunpack.c.h.b16 %v107
    %v293 = vunpack.c.l.b16 %v108
    %v294 = vunpack.c.h.b16 %v108
    %v295 = vunpack.c.l.b16 %v109
    %v296 = vunpack.c.h.b16 %v109
    %v297 = vunpack.c.l.b16 %v110
    %v298 = vunpack.c.h.b16 %v110
    %v299 = vunpack.c.l.b16 %v111
    %v300 = vunpack.c.h.b16 %v111
    %v301 = vunpack.c.l.b16 %v112
    %v302 = vunpack.c.h.b16 %v112
    %v303 = vunpack.c.l.b16 %v113
    %v304 = vunpack.c.h.b16 %v113
    %v305 = vunpack.c.l.b16 %v114
    %v306 = vunpack.c.h.b16 %v114
    %v307 = vunpack.c.l.b16 %v115
    %v308 = vunpack.c.h.b16 %v115
    %v309 = vunpack.c.l.b16 %v116
    %v310 = vunpack.c.h.b16 %v116
    %v311 = vunpack.c.l.b16 %v117
    %v312 = vunpack.c.h.b16 %v117
    %v313 = vunpack.c.l.b16 %v118
    %v314 = vunpack.c.h.b16 %v118
    %v315 = vunpack.c.l.b16 %v119
    %v316 = vunpack.c.h.b16 %v119
    %v317 = vunpack.c.l.b16 %v120
    %v318 = vunpack.c.h.b16 %v120
    %v319 = vunpack.c.l.b16 %v121
    %v320 = vunpack.c.h.b16 %v121
    %v321 = vunpack.c.l.b16 %v122
    %v322 = vunpack.c.h.b16 %v122
    %v323 = vunpack.c.l.b16 %v123
    %v324 = vunpack.c.h.b16 %v123
    %v325 = vunpack.c.l.b16 %v124
    %v326 = vunpack.c.h.b16 %v124
    %v327 = vunpack.c.l.b16 %v125
    %v328 = vunpack.c.h.b16 %v125
    %v329 = vunpack.c.l.b16 %v126
    %v330 = vunpack.c.h.b16 %v126
    %v331 = vunpack.c.l.b16 %v127
    %v332 = vunpack.c.h.b16 %v127
    %v333 = vunpack.c.l.b16 %v128
    %v334 = vunpack.c.h.b16 %v128
    %v335 = vunpack.c.l.b16 %v129
    %v336 = vunpack.c.h.b16 %v129
    %v337 = vunpack.c.l.b16 %v130
    %v338 = vunpack.c.h.b16 %v130
    %v339 = vunpack.c.l.b16 %v131
    %v340 = vunpack.c.h.b16 %v131
    %v341 = vunpack.c.l.b16 %v132
    %v342 = vunpack.c.h.b16 %v132
    %v343 = vunpack.c.l.b16 %v133
    %v344 = vunpack.c.h.b16 %v133
    %v345 = vunpack.c.l.b16 %v134
    %v346 = vunpack.c.h.b16 %v134
    %v347 = vunpack.c.l.b16 %v135
    %v348 = vunpack.c.h.b16 %v135
    %v349 = vunpack.c.l.b16 %v136
    %v350 = vunpack.c.h.b16 %v136
    %v351 = vunpack.c.l.b16 %v137
    %v352 = vunpack.c.h.b16 %v137
    %v353 = vunpack.c.l.b16 %v138
    %v354 = vunpack.c.h.b16 %v138
    %v355 = vunpack.c.l.b16 %v139
    %v356 = vunpack.c.h.b16 %v139
    %v357 = vunpack.c.l.b16 %v140
    %v358 = vunpack.c.h.b16 %v140
    %v359 = vunpack.c.l.b16 %v141
    %v360 = vunpack.c.h.b16 %v141
    %v361 = vunpack.c.l.b16 %v142
    %v362 = vunpack.c.h.b16 %v142
    %v363 = vunpack.c.l.b16 %v143
    %v364 = vunpack.c.h.b16 %v143
    %v365 = vunpack.c.l.b16 %v144
    %v366 = vunpack.c.h.b16 %v144
    %v367 = vunpack.c.l.b16 %v145
    %v368 = vunpack.c.h.b16 %v145
    %v369 = vunpack.c.l.b16 %v146
    %v370 = vunpack.c.h.b16 %v146
    %v371 = vunpack.c.l.b16 %v147
    %v372 = vunpack.c.h.b16 %v147
    %v373 = vunpack.c.l.b16 %v148
    %v374 = vunpack.c.h.b16 %v148
    %v375 = vunpack.c.l.b16 %v149
    %v376 = vunpack.c.h.b16 %v149
    %v377 = vunpack.c.l.b16 %v150
    %v378 = vunpack.c.h.b16 %v150
    %v379 = vunpack.c.l.b16 %v151
    %v380 = vunpack.c.h.b16 %v151
    %v381 = vunpack.c.l.b16 %v152
    %v382 = vunpack.c.h.b16 %v152
    %v383 = vunpack.c.l.b16 %v153
    %v384 = vunpack.c.h.b16 %v153
    %v385 = vunpack.c.l.b16 %v154
    %v386 = vunpack.c.h.b16 %v154
    %v387 = vunpack.c.l.b16 %v155
    %v388 = vunpack.c.h.b16 %v155
    %v389 = vunpack.c.l.b16 %v156
    %v390 = vunpack.c.h.b16 %v156
    %v391 = vpack.c.b16 %v271, %v263
    %v392 = vpack.c.b16 %v272, %v264
    %v393 = vpack.c.b16 %v273, %v265
    %v394 = vpack.c.b16 %v274, %v266
    %v395 = vpack.c.b16 %v275, %v267
    %v396 = vpack.c.b16 %v276, %v268
    %v397 = vpack.c.b16 %v277, %v269
    %v398 = vpack.c.b16 %v278, %v270
    %v399 = vpack.c.b16 %v287, %v279
    %v400 = vpack.c.b16 %v288, %v280
    %v401 = vpack.c.b16 %v289, %v281
    %v402 = vpack.c.b16 %v290, %v282
    %v403 = vpack.c.b16 %v291, %v283
    %v404 = vpack.c.b16 %v292, %v284
    %v405 = vpack.c.b16 %v293, %v285
    %v406 = vpack.c.b16 %v294, %v286
    %v407 = vpack.c.b16 %v303, %v295
    %v408 = vpack.c.b16 %v304, %v296
    %v409 = vpack.c.b16 %v305, %v297
    %v410 = vpack.c.b16 %v306, %v298
    %v411 = vpack.c.b16 %v307, %v299
    %v412 = vpack.c.b16 %v308, %v300
    %v413 = vpack.c.b16 %v309, %v301
    %v414 = vpack.c.b16 %v310, %v302
    %v415 = vpack.c.b16 %v319, %v311
    %v416 = vpack.c.b16 %v320, %v312
    %v417 = vpack.c.b16 %v321, %v313
    %v418 = vpack.c.b16 %v322, %v314
    %v419 = vpack.c.b16 %v323, %v315
    %v420 = vpack.c.b16 %v324, %v316
    %v421 = vpack.c.b16 %v325, %v317
    %v422 = vpack.c.b16 %v326, %v318
    %v423 = vpack.c.b16 %v335, %v327
    %v424 = vpack.c.b16 %v336, %v328
    %v425 = vpack.c.b16 %v337, %v329
    %v426 = vpack.c.b16 %v338, %v330
    %v427 = vpack.c.b16 %v339, %v331
    %v428 = vpack.c.b16 %v340, %v332
    %v429 = vpack.c.b16 %v341, %v333
    %v430 = vpack.c.b16 %v342, %v334
    %v431 = vpack.c.b16 %v351, %v343
    %v432 = vpack.c.b16 %v352, %v344
    %v433 = vpack.c.b16 %v353, %v345
    %v434 = vpack.c.b16 %v354, %v346
    %v435 = vpack.c.b16 %v355, %v347
    %v436 = vpack.c.b16 %v356, %v348
    %v437 = vpack.c.b16 %v357, %v349
    %v438 = vpack.c.b16 %v358, %v350
    %v439 = vpack.c.b16 %v367, %v359
    %v440 = vpack.c.b16 %v368, %v360
    %v441 = vpack.c.b16 %v369, %v361
    %v442 = vpack.c.b16 %v370, %v362
    %v443 = vpack.c.b16 %v371, %v363
    %v444 = vpack.c.b16 %v372, %v364
    %v445 = vpack.c.b16 %v373, %v365
    %v446 = vpack.c.b16 %v374, %v366
    %v447 = vpack.c.b16 %v383, %v375
    %v448 = vpack.c.b16 %v384, %v376
    %v449 = vpack.c.b16 %v385, %v377
    %v450 = vpack.c.b16 %v386, %v378
    %v451 = vpack.c.b16 %v387, %v379
    %v452 = vpack.c.b16 %v388, %v380
    %v453 = vpack.c.b16 %v389, %v381
    %v454 = vpack.c.b16 %v390, %v382
    %519 = vmatprep.subr.bf16.mxu0 %v448
    %520 = vmatpush1.bf16.msra.mxu0 %v447
    %521 = vmatprep.subr.bf16.mxu0 %v440
    %522 = vmatpush1.bf16.msra.mxu0 %v439
    %523 = vmatprep.subr.bf16.mxu0 %v432
    %524 = vmatpush1.bf16.msra.mxu0 %v431
    %525 = vmatprep.subr.bf16.mxu0 %v424
    %526 = vmatpush1.bf16.msra.mxu0 %v423
    %527 = vmatprep.subr.bf16.mxu0 %v416
    %528 = vmatpush1.bf16.msra.mxu0 %v415
    %529 = vmatprep.subr.bf16.mxu0 %v408
    %530 = vmatpush1.bf16.msra.mxu0 %v407
    %531 = vmatprep.subr.bf16.mxu0 %v400
    %532 = vmatpush1.bf16.msra.mxu0 %v399
    %533 = vmatprep.subr.bf16.mxu0 %v392
    %534 = vmatpush1.bf16.msra.mxu0 %v391
    %535 = vmatprep.subr.bf16.mxu0 0
    %536 = vmatpush2.bf16.msra.mxu0 0
    %537 = vmatprep.subr.bf16.mxu0 0
    %538 = vmatpush2.bf16.msra.mxu0 0
    %539 = vmatprep.subr.bf16.mxu0 0
    %540 = vmatpush2.bf16.msra.mxu0 0
    %541 = vmatprep.subr.bf16.mxu0 0
    %542 = vmatpush2.bf16.msra.mxu0 0
    %543 = vmatprep.subr.bf16.mxu0 0
    %544 = vmatpush2.bf16.msra.mxu0 0
    %545 = vmatprep.subr.bf16.mxu0 0
    %546 = vmatpush2.bf16.msra.mxu0 0
    %547 = vmatprep.subr.bf16.mxu0 0
    %548 = vmatpush2.bf16.msra.mxu0 0
    %549 = vmatprep.subr.bf16.mxu0 0
    %550 = vmatpush2.bf16.msra.mxu0 0
    %551 = vmatprep.mubr.bf16.mxu0 0
    %552 = vmatmul.mubr.bf16.gmra.mxu0 %v92
    %v553 = vpop.f32.mrf.mxu0
    %v554 = vadd.f32 %v162, %v553
    %v555 = vpop.f32.mrf.mxu0
    %v556 = vadd.f32 %v166, %v555
    %v557 = vpop.f32.mrf.mxu0
    %v558 = vpop.f32.mrf.mxu0
    %559 = vdwg.mxu0
    %560 = vmatprep.subr.bf16.mxu0 %v450
    %561 = vmatpush1.bf16.msra.mxu0 %v449
    %562 = vmatprep.subr.bf16.mxu0 %v442
    %563 = vmatpush1.bf16.msra.mxu0 %v441
    %564 = vmatprep.subr.bf16.mxu0 %v434
    %565 = vmatpush1.bf16.msra.mxu0 %v433
    %566 = vmatprep.subr.bf16.mxu0 %v426
    %567 = vmatpush1.bf16.msra.mxu0 %v425
    %568 = vmatprep.subr.bf16.mxu0 %v418
    %569 = vmatpush1.bf16.msra.mxu0 %v417
    %570 = vmatprep.subr.bf16.mxu0 %v410
    %571 = vmatpush1.bf16.msra.mxu0 %v409
    %572 = vmatprep.subr.bf16.mxu0 %v402
    %573 = vmatpush1.bf16.msra.mxu0 %v401
    %574 = vmatprep.subr.bf16.mxu0 %v394
    %575 = vmatpush1.bf16.msra.mxu0 %v393
    %576 = vmatprep.subr.bf16.mxu0 0
    %577 = vmatpush2.bf16.msra.mxu0 0
    %578 = vmatprep.subr.bf16.mxu0 0
    %579 = vmatpush2.bf16.msra.mxu0 0
    %580 = vmatprep.subr.bf16.mxu0 0
    %581 = vmatpush2.bf16.msra.mxu0 0
    %582 = vmatprep.subr.bf16.mxu0 0
    %583 = vmatpush2.bf16.msra.mxu0 0
    %584 = vmatprep.subr.bf16.mxu0 0
    %585 = vmatpush2.bf16.msra.mxu0 0
    %586 = vmatprep.subr.bf16.mxu0 0
    %587 = vmatpush2.bf16.msra.mxu0 0
    %588 = vmatprep.subr.bf16.mxu0 0
    %589 = vmatpush2.bf16.msra.mxu0 0
    %590 = vmatprep.subr.bf16.mxu0 0
    %591 = vmatpush2.bf16.msra.mxu0 0
    %592 = vmatprep.mubr.bf16.mxu0 0
    %593 = vmatmul.mubr.bf16.gmra.mxu0 %v92
    %v594 = vpop.f32.mrf.mxu0
    %v595 = vadd.f32 %v170, %v594
    %v596 = vpop.f32.mrf.mxu0
    %v597 = vadd.f32 %v174, %v596
    %v598 = vpop.f32.mrf.mxu0
    %v599 = vpop.f32.mrf.mxu0
    %600 = vdwg.mxu0
    %601 = vmatprep.subr.bf16.mxu0 %v452
    %602 = vmatpush1.bf16.msra.mxu0 %v451
    %603 = vmatprep.subr.bf16.mxu0 %v444
    %604 = vmatpush1.bf16.msra.mxu0 %v443
    %605 = vmatprep.subr.bf16.mxu0 %v436
    %606 = vmatpush1.bf16.msra.mxu0 %v435
    %607 = vmatprep.subr.bf16.mxu0 %v428
    %608 = vmatpush1.bf16.msra.mxu0 %v427
    %609 = vmatprep.subr.bf16.mxu0 %v420
    %610 = vmatpush1.bf16.msra.mxu0 %v419
    %611 = vmatprep.subr.bf16.mxu0 %v412
    %612 = vmatpush1.bf16.msra.mxu0 %v411
    %613 = vmatprep.subr.bf16.mxu0 %v404
    %614 = vmatpush1.bf16.msra.mxu0 %v403
    %615 = vmatprep.subr.bf16.mxu0 %v396
    %616 = vmatpush1.bf16.msra.mxu0 %v395
    %617 = vmatprep.subr.bf16.mxu0 0
    %618 = vmatpush2.bf16.msra.mxu0 0
    %619 = vmatprep.subr.bf16.mxu0 0
    %620 = vmatpush2.bf16.msra.mxu0 0
    %621 = vmatprep.subr.bf16.mxu0 0
    %622 = vmatpush2.bf16.msra.mxu0 0
    %623 = vmatprep.subr.bf16.mxu0 0
    %624 = vmatpush2.bf16.msra.mxu0 0
    %625 = vmatprep.subr.bf16.mxu0 0
    %626 = vmatpush2.bf16.msra.mxu0 0
    %627 = vmatprep.subr.bf16.mxu0 0
    %628 = vmatpush2.bf16.msra.mxu0 0
    %629 = vmatprep.subr.bf16.mxu0 0
    %630 = vmatpush2.bf16.msra.mxu0 0
    %631 = vmatprep.subr.bf16.mxu0 0
    %632 = vmatpush2.bf16.msra.mxu0 0
    %633 = vmatprep.mubr.bf16.mxu0 0
    %634 = vmatmul.mubr.bf16.gmra.mxu0 %v92
    %v635 = vpop.f32.mrf.mxu0
    %v636 = vadd.f32 %v178, %v635
    %v637 = vpop.f32.mrf.mxu0
    %v638 = vadd.f32 %v182, %v637
    %v639 = vpop.f32.mrf.mxu0
    %v640 = vpop.f32.mrf.mxu0
    %641 = vdwg.mxu0
    %642 = vmatprep.subr.bf16.mxu0 %v454
    %643 = vmatpush1.bf16.msra.mxu0 %v453
    %644 = vmatprep.subr.bf16.mxu0 %v446
    %645 = vmatpush1.bf16.msra.mxu0 %v445
    %646 = vmatprep.subr.bf16.mxu0 %v438
    %647 = vmatpush1.bf16.msra.mxu0 %v437
    %648 = vmatprep.subr.bf16.mxu0 %v430
    %649 = vmatpush1.bf16.msra.mxu0 %v429
    %650 = vmatprep.subr.bf16.mxu0 %v422
    %651 = vmatpush1.bf16.msra.mxu0 %v421
    %652 = vmatprep.subr.bf16.mxu0 %v414
    %653 = vmatpush1.bf16.msra.mxu0 %v413
    %654 = vmatprep.subr.bf16.mxu0 %v406
    %655 = vmatpush1.bf16.msra.mxu0 %v405
    %656 = vmatprep.subr.bf16.mxu0 %v398
    %657 = vmatpush1.bf16.msra.mxu0 %v397
    %658 = vmatprep.subr.bf16.mxu0 0
    %659 = vmatpush2.bf16.msra.mxu0 0
    %660 = vmatprep.subr.bf16.mxu0 0
    %661 = vmatpush2.bf16.msra.mxu0 0
    %662 = vmatprep.subr.bf16.mxu0 0
    %663 = vmatpush2.bf16.msra.mxu0 0
    %664 = vmatprep.subr.bf16.mxu0 0
    %665 = vmatpush2.bf16.msra.mxu0 0
    %666 = vmatprep.subr.bf16.mxu0 0
    %667 = vmatpush2.bf16.msra.mxu0 0
    %668 = vmatprep.subr.bf16.mxu0 0
    %669 = vmatpush2.bf16.msra.mxu0 0
    %670 = vmatprep.subr.bf16.mxu0 0
    %671 = vmatpush2.bf16.msra.mxu0 0
    %672 = vmatprep.subr.bf16.mxu0 0
    %673 = vmatpush2.bf16.msra.mxu0 0
    %674 = vmatprep.mubr.bf16.mxu0 0
    %675 = vmatmul.mubr.bf16.gmra.mxu0 %v92
    %v676 = vpop.f32.mrf.mxu0
    %v677 = vadd.f32 %v186, %v676
    %v678 = vpop.f32.mrf.mxu0
    %v679 = vadd.f32 %v190, %v678
    %v680 = vpop.f32.mrf.mxu0
    %v681 = vpop.f32.mrf.mxu0
    %682 = vdwg.mxu0
    %v683 = vmax.f32 %v554, 0.0
    %v684 = vmax.f32 %v556, 0.0
    %v685 = vmax.f32 %v595, 0.0
    %v686 = vmax.f32 %v597, 0.0
    %v687 = vmax.f32 %v636, 0.0
    %v688 = vmax.f32 %v638, 0.0
    %v689 = vmax.f32 %v677, 0.0
    %v690 = vmax.f32 %v679, 0.0
    %v691 = vpack.c.bf16 %v683, %v683
    %v692 = vpack.c.bf16 %v684, %v684
    %v693 = vpack.c.bf16 %v685, %v685
    %v694 = vpack.c.bf16 %v686, %v686
    %v695 = vpack.c.bf16 %v687, %v687
    %v696 = vpack.c.bf16 %v688, %v688
    %v697 = vpack.c.bf16 %v689, %v689
    %v698 = vpack.c.bf16 %v690, %v690
    %v699 = vld [vmem:[#allocation8] sm:$0xff]
    %v700 = vld [vmem:[#allocation8 + $0x8] sm:$0xff]
    %v701 = vld [vmem:[#allocation8 + $0x10] sm:$0xff]
    %v702 = vld [vmem:[#allocation8 + $0x18] sm:$0xff]
    %v703 = vld [vmem:[#allocation8 + $0x20] sm:$0xff]
    %v704 = vld [vmem:[#allocation8 + $0x28] sm:$0xff]
    %v705 = vld [vmem:[#allocation8 + $0x30] sm:$0xff]
    %v706 = vld [vmem:[#allocation8 + $0x38] sm:$0xff]
    %v707 = vld [vmem:[#allocation8 + $0x40] sm:$0xff]
    %v708 = vld [vmem:[#allocation8 + $0x48] sm:$0xff]
    %v709 = vld [vmem:[#allocation8 + $0x50] sm:$0xff]
    %v710 = vld [vmem:[#allocation8 + $0x58] sm:$0xff]
    %v711 = vld [vmem:[#allocation8 + $0x60] sm:$0xff]
    %v712 = vld [vmem:[#allocation8 + $0x68] sm:$0xff]
    %v713 = vld [vmem:[#allocation8 + $0x70] sm:$0xff]
    %v714 = vld [vmem:[#allocation8 + $0x78] sm:$0xff]
    %v715 = vld [vmem:[#allocation8 + $0x80] sm:$0xff]
    %v716 = vld [vmem:[#allocation8 + $0x88] sm:$0xff]
    %v717 = vld [vmem:[#allocation8 + $0x90] sm:$0xff]
    %v718 = vld [vmem:[#allocation8 + $0x98] sm:$0xff]
    %v719 = vld [vmem:[#allocation8 + $0xa0] sm:$0xff]
    %v720 = vld [vmem:[#allocation8 + $0xa8] sm:$0xff]
    %v721 = vld [vmem:[#allocation8 + $0xb0] sm:$0xff]
    %v722 = vld [vmem:[#allocation8 + $0xb8] sm:$0xff]
    %v723 = vld [vmem:[#allocation8 + $0xc0] sm:$0xff]
    %v724 = vld [vmem:[#allocation8 + $0xc8] sm:$0xff]
    %v725 = vld [vmem:[#allocation8 + $0xd0] sm:$0xff]
    %v726 = vld [vmem:[#allocation8 + $0xd8] sm:$0xff]
    %v727 = vld [vmem:[#allocation8 + $0xe0] sm:$0xff]
    %v728 = vld [vmem:[#allocation8 + $0xe8] sm:$0xff]
    %v729 = vld [vmem:[#allocation8 + $0xf0] sm:$0xff]
    %v730 = vld [vmem:[#allocation8 + $0xf8] sm:$0xff]
    %v731 = vld [vmem:[#allocation8 + $0x100] sm:$0xff]
    %v732 = vld [vmem:[#allocation8 + $0x108] sm:$0xff]
    %v733 = vld [vmem:[#allocation8 + $0x110] sm:$0xff]
    %v734 = vld [vmem:[#allocation8 + $0x118] sm:$0xff]
    %v735 = vld [vmem:[#allocation8 + $0x120] sm:$0xff]
    %v736 = vld [vmem:[#allocation8 + $0x128] sm:$0xff]
    %v737 = vld [vmem:[#allocation8 + $0x130] sm:$0xff]
    %v738 = vld [vmem:[#allocation8 + $0x138] sm:$0xff]
    %v739 = vld [vmem:[#allocation8 + $0x140] sm:$0xff]
    %v740 = vld [vmem:[#allocation8 + $0x148] sm:$0xff]
    %v741 = vld [vmem:[#allocation8 + $0x150] sm:$0xff]
    %v742 = vld [vmem:[#allocation8 + $0x158] sm:$0xff]
    %v743 = vld [vmem:[#allocation8 + $0x160] sm:$0xff]
    %v744 = vld [vmem:[#allocation8 + $0x168] sm:$0xff]
    %v745 = vld [vmem:[#allocation8 + $0x170] sm:$0xff]
    %v746 = vld [vmem:[#allocation8 + $0x178] sm:$0xff]
    %v747 = vld [vmem:[#allocation8 + $0x180] sm:$0xff]
    %v748 = vld [vmem:[#allocation8 + $0x188] sm:$0xff]
    %v749 = vld [vmem:[#allocation8 + $0x190] sm:$0xff]
    %v750 = vld [vmem:[#allocation8 + $0x198] sm:$0xff]
    %v751 = vld [vmem:[#allocation8 + $0x1a0] sm:$0xff]
    %v752 = vld [vmem:[#allocation8 + $0x1a8] sm:$0xff]
    %v753 = vld [vmem:[#allocation8 + $0x1b0] sm:$0xff]
    %v754 = vld [vmem:[#allocation8 + $0x1b8] sm:$0xff]
    %v755 = vld [vmem:[#allocation8 + $0x1c0] sm:$0xff]
    %v756 = vld [vmem:[#allocation8 + $0x1c8] sm:$0xff]
    %v757 = vld [vmem:[#allocation8 + $0x1d0] sm:$0xff]
    %v758 = vld [vmem:[#allocation8 + $0x1d8] sm:$0xff]
    %v759 = vld [vmem:[#allocation8 + $0x1e0] sm:$0xff]
    %v760 = vld [vmem:[#allocation8 + $0x1e8] sm:$0xff]
    %v761 = vld [vmem:[#allocation8 + $0x1f0] sm:$0xff]
    %v762 = vld [vmem:[#allocation8 + $0x1f8] sm:$0xff]
    %v763 = vld [vmem:[#allocation8 + $0x200] sm:$0xff]
    %v764 = vld [vmem:[#allocation8 + $0x208] sm:$0xff]
    %v765 = vld [vmem:[#allocation8 + $0x210] sm:$0xff]
    %v766 = vld [vmem:[#allocation8 + $0x218] sm:$0xff]
    %v767 = vld [vmem:[#allocation8 + $0x220] sm:$0xff]
    %v768 = vld [vmem:[#allocation8 + $0x228] sm:$0xff]
    %v769 = vld [vmem:[#allocation8 + $0x230] sm:$0xff]
    %v770 = vld [vmem:[#allocation8 + $0x238] sm:$0xff]
    %v771 = vld [vmem:[#allocation8 + $0x240] sm:$0xff]
    %v772 = vld [vmem:[#allocation8 + $0x248] sm:$0xff]
    %v773 = vld [vmem:[#allocation8 + $0x250] sm:$0xff]
    %v774 = vld [vmem:[#allocation8 + $0x258] sm:$0xff]
    %v775 = vld [vmem:[#allocation8 + $0x260] sm:$0xff]
    %v776 = vld [vmem:[#allocation8 + $0x268] sm:$0xff]
    %v777 = vld [vmem:[#allocation8 + $0x270] sm:$0xff]
    %v778 = vld [vmem:[#allocation8 + $0x278] sm:$0xff]
    %v779 = vld [vmem:[#allocation8 + $0x280] sm:$0xff]
    %v780 = vld [vmem:[#allocation8 + $0x288] sm:$0xff]
    %v781 = vld [vmem:[#allocation8 + $0x290] sm:$0xff]
    %v782 = vld [vmem:[#allocation8 + $0x298] sm:$0xff]
    %v783 = vld [vmem:[#allocation8 + $0x2a0] sm:$0xff]
    %v784 = vld [vmem:[#allocation8 + $0x2a8] sm:$0xff]
    %v785 = vld [vmem:[#allocation8 + $0x2b0] sm:$0xff]
    %v786 = vld [vmem:[#allocation8 + $0x2b8] sm:$0xff]
    %v787 = vld [vmem:[#allocation8 + $0x2c0] sm:$0xff]
    %v788 = vld [vmem:[#allocation8 + $0x2c8] sm:$0xff]
    %v789 = vld [vmem:[#allocation8 + $0x2d0] sm:$0xff]
    %v790 = vld [vmem:[#allocation8 + $0x2d8] sm:$0xff]
    %v791 = vld [vmem:[#allocation8 + $0x2e0] sm:$0xff]
    %v792 = vld [vmem:[#allocation8 + $0x2e8] sm:$0xff]
    %v793 = vld [vmem:[#allocation8 + $0x2f0] sm:$0xff]
    %v794 = vld [vmem:[#allocation8 + $0x2f8] sm:$0xff]
    %v795 = vld [vmem:[#allocation8 + $0x300] sm:$0xff]
    %v796 = vld [vmem:[#allocation8 + $0x308] sm:$0xff]
    %v797 = vld [vmem:[#allocation8 + $0x310] sm:$0xff]
    %v798 = vld [vmem:[#allocation8 + $0x318] sm:$0xff]
    %v799 = vld [vmem:[#allocation8 + $0x320] sm:$0xff]
    %v800 = vld [vmem:[#allocation8 + $0x328] sm:$0xff]
    %v801 = vld [vmem:[#allocation8 + $0x330] sm:$0xff]
    %v802 = vld [vmem:[#allocation8 + $0x338] sm:$0xff]
    %v803 = vld [vmem:[#allocation8 + $0x340] sm:$0xff]
    %v804 = vld [vmem:[#allocation8 + $0x348] sm:$0xff]
    %v805 = vld [vmem:[#allocation8 + $0x350] sm:$0xff]
    %v806 = vld [vmem:[#allocation8 + $0x358] sm:$0xff]
    %v807 = vld [vmem:[#allocation8 + $0x360] sm:$0xff]
    %v808 = vld [vmem:[#allocation8 + $0x368] sm:$0xff]
    %v809 = vld [vmem:[#allocation8 + $0x370] sm:$0xff]
    %v810 = vld [vmem:[#allocation8 + $0x378] sm:$0xff]
    %v811 = vld [vmem:[#allocation8 + $0x380] sm:$0xff]
    %v812 = vld [vmem:[#allocation8 + $0x388] sm:$0xff]
    %v813 = vld [vmem:[#allocation8 + $0x390] sm:$0xff]
    %v814 = vld [vmem:[#allocation8 + $0x398] sm:$0xff]
    %v815 = vld [vmem:[#allocation8 + $0x3a0] sm:$0xff]
    %v816 = vld [vmem:[#allocation8 + $0x3a8] sm:$0xff]
    %v817 = vld [vmem:[#allocation8 + $0x3b0] sm:$0xff]
    %v818 = vld [vmem:[#allocation8 + $0x3b8] sm:$0xff]
    %v819 = vld [vmem:[#allocation8 + $0x3c0] sm:$0xff]
    %v820 = vld [vmem:[#allocation8 + $0x3c8] sm:$0xff]
    %v821 = vld [vmem:[#allocation8 + $0x3d0] sm:$0xff]
    %v822 = vld [vmem:[#allocation8 + $0x3d8] sm:$0xff]
    %v823 = vld [vmem:[#allocation8 + $0x3e0] sm:$0xff]
    %v824 = vld [vmem:[#allocation8 + $0x3e8] sm:$0xff]
    %v825 = vld [vmem:[#allocation8 + $0x3f0] sm:$0xff]
    %v826 = vld [vmem:[#allocation8 + $0x3f8] sm:$0xff]
    %v827 = vld [vmem:[%s4] sm:$0x3]
    %v829 = vlaneseq
    %v830 = vshrl.u32 %v829, 7
    %v831 = vsub.s32 0, %v830
    %v832 = vrot.slane %v827, %v831
    %v833 = vlaneseq
    %v834 = vshrl.u32 %v833, 7
    %v835 = vsub.s32 1, %v834
    %v836 = vrot.slane %v827, %v835
    %v967 = vunpack.c.l.b16 %v699
    %v968 = vunpack.c.h.b16 %v699
    %v969 = vunpack.c.l.b16 %v700
    %v970 = vunpack.c.h.b16 %v700
    %v971 = vunpack.c.l.b16 %v701
    %v972 = vunpack.c.h.b16 %v701
    %v973 = vunpack.c.l.b16 %v702
    %v974 = vunpack.c.h.b16 %v702
    %v975 = vunpack.c.l.b16 %v703
    %v976 = vunpack.c.h.b16 %v703
    %v977 = vunpack.c.l.b16 %v704
    %v978 = vunpack.c.h.b16 %v704
    %v979 = vunpack.c.l.b16 %v705
    %v980 = vunpack.c.h.b16 %v705
    %v981 = vunpack.c.l.b16 %v706
    %v982 = vunpack.c.h.b16 %v706
    %v983 = vunpack.c.l.b16 %v707
    %v984 = vunpack.c.h.b16 %v707
    %v985 = vunpack.c.l.b16 %v708
    %v986 = vunpack.c.h.b16 %v708
    %v987 = vunpack.c.l.b16 %v709
    %v988 = vunpack.c.h.b16 %v709
    %v989 = vunpack.c.l.b16 %v710
    %v990 = vunpack.c.h.b16 %v710
    %v991 = vunpack.c.l.b16 %v711
    %v992 = vunpack.c.h.b16 %v711
    %v993 = vunpack.c.l.b16 %v712
    %v994 = vunpack.c.h.b16 %v712
    %v995 = vunpack.c.l.b16 %v713
    %v996 = vunpack.c.h.b16 %v713
    %v997 = vunpack.c.l.b16 %v714
    %v998 = vunpack.c.h.b16 %v714
    %v999 = vunpack.c.l.b16 %v715
    %v1000 = vunpack.c.h.b16 %v715
    %v1001 = vunpack.c.l.b16 %v716
    %v1002 = vunpack.c.h.b16 %v716
    %v1003 = vunpack.c.l.b16 %v717
    %v1004 = vunpack.c.h.b16 %v717
    %v1005 = vunpack.c.l.b16 %v718
    %v1006 = vunpack.c.h.b16 %v718
    %v1007 = vunpack.c.l.b16 %v719
    %v1008 = vunpack.c.h.b16 %v719
    %v1009 = vunpack.c.l.b16 %v720
    %v1010 = vunpack.c.h.b16 %v720
    %v1011 = vunpack.c.l.b16 %v721
    %v1012 = vunpack.c.h.b16 %v721
    %v1013 = vunpack.c.l.b16 %v722
    %v1014 = vunpack.c.h.b16 %v722
    %v1015 = vunpack.c.l.b16 %v723
    %v1016 = vunpack.c.h.b16 %v723
    %v1017 = vunpack.c.l.b16 %v724
    %v1018 = vunpack.c.h.b16 %v724
    %v1019 = vunpack.c.l.b16 %v725
    %v1020 = vunpack.c.h.b16 %v725
    %v1021 = vunpack.c.l.b16 %v726
    %v1022 = vunpack.c.h.b16 %v726
    %v1023 = vunpack.c.l.b16 %v727
    %v1024 = vunpack.c.h.b16 %v727
    %v1025 = vunpack.c.l.b16 %v728
    %v1026 = vunpack.c.h.b16 %v728
    %v1027 = vunpack.c.l.b16 %v729
    %v1028 = vunpack.c.h.b16 %v729
    %v1029 = vunpack.c.l.b16 %v730
    %v1030 = vunpack.c.h.b16 %v730
    %v1031 = vunpack.c.l.b16 %v731
    %v1032 = vunpack.c.h.b16 %v731
    %v1033 = vunpack.c.l.b16 %v732
    %v1034 = vunpack.c.h.b16 %v732
    %v1035 = vunpack.c.l.b16 %v733
    %v1036 = vunpack.c.h.b16 %v733
    %v1037 = vunpack.c.l.b16 %v734
    %v1038 = vunpack.c.h.b16 %v734
    %v1039 = vunpack.c.l.b16 %v735
    %v1040 = vunpack.c.h.b16 %v735
    %v1041 = vunpack.c.l.b16 %v736
    %v1042 = vunpack.c.h.b16 %v736
    %v1043 = vunpack.c.l.b16 %v737
    %v1044 = vunpack.c.h.b16 %v737
    %v1045 = vunpack.c.l.b16 %v738
    %v1046 = vunpack.c.h.b16 %v738
    %v1047 = vunpack.c.l.b16 %v739
    %v1048 = vunpack.c.h.b16 %v739
    %v1049 = vunpack.c.l.b16 %v740
    %v1050 = vunpack.c.h.b16 %v740
    %v1051 = vunpack.c.l.b16 %v741
    %v1052 = vunpack.c.h.b16 %v741
    %v1053 = vunpack.c.l.b16 %v742
    %v1054 = vunpack.c.h.b16 %v742
    %v1055 = vunpack.c.l.b16 %v743
    %v1056 = vunpack.c.h.b16 %v743
    %v1057 = vunpack.c.l.b16 %v744
    %v1058 = vunpack.c.h.b16 %v744
    %v1059 = vunpack.c.l.b16 %v745
    %v1060 = vunpack.c.h.b16 %v745
    %v1061 = vunpack.c.l.b16 %v746
    %v1062 = vunpack.c.h.b16 %v746
    %v1063 = vunpack.c.l.b16 %v747
    %v1064 = vunpack.c.h.b16 %v747
    %v1065 = vunpack.c.l.b16 %v748
    %v1066 = vunpack.c.h.b16 %v748
    %v1067 = vunpack.c.l.b16 %v749
    %v1068 = vunpack.c.h.b16 %v749
    %v1069 = vunpack.c.l.b16 %v750
    %v1070 = vunpack.c.h.b16 %v750
    %v1071 = vunpack.c.l.b16 %v751
    %v1072 = vunpack.c.h.b16 %v751
    %v1073 = vunpack.c.l.b16 %v752
    %v1074 = vunpack.c.h.b16 %v752
    %v1075 = vunpack.c.l.b16 %v753
    %v1076 = vunpack.c.h.b16 %v753
    %v1077 = vunpack.c.l.b16 %v754
    %v1078 = vunpack.c.h.b16 %v754
    %v1079 = vunpack.c.l.b16 %v755
    %v1080 = vunpack.c.h.b16 %v755
    %v1081 = vunpack.c.l.b16 %v756
    %v1082 = vunpack.c.h.b16 %v756
    %v1083 = vunpack.c.l.b16 %v757
    %v1084 = vunpack.c.h.b16 %v757
    %v1085 = vunpack.c.l.b16 %v758
    %v1086 = vunpack.c.h.b16 %v758
    %v1087 = vunpack.c.l.b16 %v759
    %v1088 = vunpack.c.h.b16 %v759
    %v1089 = vunpack.c.l.b16 %v760
    %v1090 = vunpack.c.h.b16 %v760
    %v1091 = vunpack.c.l.b16 %v761
    %v1092 = vunpack.c.h.b16 %v761
    %v1093 = vunpack.c.l.b16 %v762
    %v1094 = vunpack.c.h.b16 %v762
    %v1095 = vunpack.c.l.b16 %v763
    %v1096 = vunpack.c.h.b16 %v763
    %v1097 = vunpack.c.l.b16 %v764
    %v1098 = vunpack.c.h.b16 %v764
    %v1099 = vunpack.c.l.b16 %v765
    %v1100 = vunpack.c.h.b16 %v765
    %v1101 = vunpack.c.l.b16 %v766
    %v1102 = vunpack.c.h.b16 %v766
    %v1103 = vunpack.c.l.b16 %v767
    %v1104 = vunpack.c.h.b16 %v767
    %v1105 = vunpack.c.l.b16 %v768
    %v1106 = vunpack.c.h.b16 %v768
    %v1107 = vunpack.c.l.b16 %v769
    %v1108 = vunpack.c.h.b16 %v769
    %v1109 = vunpack.c.l.b16 %v770
    %v1110 = vunpack.c.h.b16 %v770
    %v1111 = vunpack.c.l.b16 %v771
    %v1112 = vunpack.c.h.b16 %v771
    %v1113 = vunpack.c.l.b16 %v772
    %v1114 = vunpack.c.h.b16 %v772
    %v1115 = vunpack.c.l.b16 %v773
    %v1116 = vunpack.c.h.b16 %v773
    %v1117 = vunpack.c.l.b16 %v774
    %v1118 = vunpack.c.h.b16 %v774
    %v1119 = vunpack.c.l.b16 %v775
    %v1120 = vunpack.c.h.b16 %v775
    %v1121 = vunpack.c.l.b16 %v776
    %v1122 = vunpack.c.h.b16 %v776
    %v1123 = vunpack.c.l.b16 %v777
    %v1124 = vunpack.c.h.b16 %v777
    %v1125 = vunpack.c.l.b16 %v778
    %v1126 = vunpack.c.h.b16 %v778
    %v1127 = vunpack.c.l.b16 %v779
    %v1128 = vunpack.c.h.b16 %v779
    %v1129 = vunpack.c.l.b16 %v780
    %v1130 = vunpack.c.h.b16 %v780
    %v1131 = vunpack.c.l.b16 %v781
    %v1132 = vunpack.c.h.b16 %v781
    %v1133 = vunpack.c.l.b16 %v782
    %v1134 = vunpack.c.h.b16 %v782
    %v1135 = vunpack.c.l.b16 %v783
    %v1136 = vunpack.c.h.b16 %v783
    %v1137 = vunpack.c.l.b16 %v784
    %v1138 = vunpack.c.h.b16 %v784
    %v1139 = vunpack.c.l.b16 %v785
    %v1140 = vunpack.c.h.b16 %v785
    %v1141 = vunpack.c.l.b16 %v786
    %v1142 = vunpack.c.h.b16 %v786
    %v1143 = vunpack.c.l.b16 %v787
    %v1144 = vunpack.c.h.b16 %v787
    %v1145 = vunpack.c.l.b16 %v788
    %v1146 = vunpack.c.h.b16 %v788
    %v1147 = vunpack.c.l.b16 %v789
    %v1148 = vunpack.c.h.b16 %v789
    %v1149 = vunpack.c.l.b16 %v790
    %v1150 = vunpack.c.h.b16 %v790
    %v1151 = vunpack.c.l.b16 %v791
    %v1152 = vunpack.c.h.b16 %v791
    %v1153 = vunpack.c.l.b16 %v792
    %v1154 = vunpack.c.h.b16 %v792
    %v1155 = vunpack.c.l.b16 %v793
    %v1156 = vunpack.c.h.b16 %v793
    %v1157 = vunpack.c.l.b16 %v794
    %v1158 = vunpack.c.h.b16 %v794
    %v1159 = vunpack.c.l.b16 %v795
    %v1160 = vunpack.c.h.b16 %v795
    %v1161 = vunpack.c.l.b16 %v796
    %v1162 = vunpack.c.h.b16 %v796
    %v1163 = vunpack.c.l.b16 %v797
    %v1164 = vunpack.c.h.b16 %v797
    %v1165 = vunpack.c.l.b16 %v798
    %v1166 = vunpack.c.h.b16 %v798
    %v1167 = vunpack.c.l.b16 %v799
    %v1168 = vunpack.c.h.b16 %v799
    %v1169 = vunpack.c.l.b16 %v800
    %v1170 = vunpack.c.h.b16 %v800
    %v1171 = vunpack.c.l.b16 %v801
    %v1172 = vunpack.c.h.b16 %v801
    %v1173 = vunpack.c.l.b16 %v802
    %v1174 = vunpack.c.h.b16 %v802
    %v1175 = vunpack.c.l.b16 %v803
    %v1176 = vunpack.c.h.b16 %v803
    %v1177 = vunpack.c.l.b16 %v804
    %v1178 = vunpack.c.h.b16 %v804
    %v1179 = vunpack.c.l.b16 %v805
    %v1180 = vunpack.c.h.b16 %v805
    %v1181 = vunpack.c.l.b16 %v806
    %v1182 = vunpack.c.h.b16 %v806
    %v1183 = vunpack.c.l.b16 %v807
    %v1184 = vunpack.c.h.b16 %v807
    %v1185 = vunpack.c.l.b16 %v808
    %v1186 = vunpack.c.h.b16 %v808
    %v1187 = vunpack.c.l.b16 %v809
    %v1188 = vunpack.c.h.b16 %v809
    %v1189 = vunpack.c.l.b16 %v810
    %v1190 = vunpack.c.h.b16 %v810
    %v1191 = vunpack.c.l.b16 %v811
    %v1192 = vunpack.c.h.b16 %v811
    %v1193 = vunpack.c.l.b16 %v812
    %v1194 = vunpack.c.h.b16 %v812
    %v1195 = vunpack.c.l.b16 %v813
    %v1196 = vunpack.c.h.b16 %v813
    %v1197 = vunpack.c.l.b16 %v814
    %v1198 = vunpack.c.h.b16 %v814
    %v1199 = vunpack.c.l.b16 %v815
    %v1200 = vunpack.c.h.b16 %v815
    %v1201 = vunpack.c.l.b16 %v816
    %v1202 = vunpack.c.h.b16 %v816
    %v1203 = vunpack.c.l.b16 %v817
    %v1204 = vunpack.c.h.b16 %v817
    %v1205 = vunpack.c.l.b16 %v818
    %v1206 = vunpack.c.h.b16 %v818
    %v1207 = vunpack.c.l.b16 %v819
    %v1208 = vunpack.c.h.b16 %v819
    %v1209 = vunpack.c.l.b16 %v820
    %v1210 = vunpack.c.h.b16 %v820
    %v1211 = vunpack.c.l.b16 %v821
    %v1212 = vunpack.c.h.b16 %v821
    %v1213 = vunpack.c.l.b16 %v822
    %v1214 = vunpack.c.h.b16 %v822
    %v1215 = vunpack.c.l.b16 %v823
    %v1216 = vunpack.c.h.b16 %v823
    %v1217 = vunpack.c.l.b16 %v824
    %v1218 = vunpack.c.h.b16 %v824
    %v1219 = vunpack.c.l.b16 %v825
    %v1220 = vunpack.c.h.b16 %v825
    %v1221 = vunpack.c.l.b16 %v826
    %v1222 = vunpack.c.h.b16 %v826
    %v1223 = vpack.c.b16 %v969, %v967
    %v1224 = vpack.c.b16 %v970, %v968
    %v1225 = vpack.c.b16 %v973, %v971
    %v1226 = vpack.c.b16 %v974, %v972
    %v1227 = vpack.c.b16 %v977, %v975
    %v1228 = vpack.c.b16 %v978, %v976
    %v1229 = vpack.c.b16 %v981, %v979
    %v1230 = vpack.c.b16 %v982, %v980
    %v1231 = vpack.c.b16 %v985, %v983
    %v1232 = vpack.c.b16 %v986, %v984
    %v1233 = vpack.c.b16 %v989, %v987
    %v1234 = vpack.c.b16 %v990, %v988
    %v1235 = vpack.c.b16 %v993, %v991
    %v1236 = vpack.c.b16 %v994, %v992
    %v1237 = vpack.c.b16 %v997, %v995
    %v1238 = vpack.c.b16 %v998, %v996
    %v1239 = vpack.c.b16 %v1001, %v999
    %v1240 = vpack.c.b16 %v1002, %v1000
    %v1241 = vpack.c.b16 %v1005, %v1003
    %v1242 = vpack.c.b16 %v1006, %v1004
    %v1243 = vpack.c.b16 %v1009, %v1007
    %v1244 = vpack.c.b16 %v1010, %v1008
    %v1245 = vpack.c.b16 %v1013, %v1011
    %v1246 = vpack.c.b16 %v1014, %v1012
    %v1247 = vpack.c.b16 %v1017, %v1015
    %v1248 = vpack.c.b16 %v1018, %v1016
    %v1249 = vpack.c.b16 %v1021, %v1019
    %v1250 = vpack.c.b16 %v1022, %v1020
    %v1251 = vpack.c.b16 %v1025, %v1023
    %v1252 = vpack.c.b16 %v1026, %v1024
    %v1253 = vpack.c.b16 %v1029, %v1027
    %v1254 = vpack.c.b16 %v1030, %v1028
    %v1255 = vpack.c.b16 %v1033, %v1031
    %v1256 = vpack.c.b16 %v1034, %v1032
    %v1257 = vpack.c.b16 %v1037, %v1035
    %v1258 = vpack.c.b16 %v1038, %v1036
    %v1259 = vpack.c.b16 %v1041, %v1039
    %v1260 = vpack.c.b16 %v1042, %v1040
    %v1261 = vpack.c.b16 %v1045, %v1043
    %v1262 = vpack.c.b16 %v1046, %v1044
    %v1263 = vpack.c.b16 %v1049, %v1047
    %v1264 = vpack.c.b16 %v1050, %v1048
    %v1265 = vpack.c.b16 %v1053, %v1051
    %v1266 = vpack.c.b16 %v1054, %v1052
    %v1267 = vpack.c.b16 %v1057, %v1055
    %v1268 = vpack.c.b16 %v1058, %v1056
    %v1269 = vpack.c.b16 %v1061, %v1059
    %v1270 = vpack.c.b16 %v1062, %v1060
    %v1271 = vpack.c.b16 %v1065, %v1063
    %v1272 = vpack.c.b16 %v1066, %v1064
    %v1273 = vpack.c.b16 %v1069, %v1067
    %v1274 = vpack.c.b16 %v1070, %v1068
    %v1275 = vpack.c.b16 %v1073, %v1071
    %v1276 = vpack.c.b16 %v1074, %v1072
    %v1277 = vpack.c.b16 %v1077, %v1075
    %v1278 = vpack.c.b16 %v1078, %v1076
    %v1279 = vpack.c.b16 %v1081, %v1079
    %v1280 = vpack.c.b16 %v1082, %v1080
    %v1281 = vpack.c.b16 %v1085, %v1083
    %v1282 = vpack.c.b16 %v1086, %v1084
    %v1283 = vpack.c.b16 %v1089, %v1087
    %v1284 = vpack.c.b16 %v1090, %v1088
    %v1285 = vpack.c.b16 %v1093, %v1091
    %v1286 = vpack.c.b16 %v1094, %v1092
    %v1287 = vpack.c.b16 %v1097, %v1095
    %v1288 = vpack.c.b16 %v1098, %v1096
    %v1289 = vpack.c.b16 %v1101, %v1099
    %v1290 = vpack.c.b16 %v1102, %v1100
    %v1291 = vpack.c.b16 %v1105, %v1103
    %v1292 = vpack.c.b16 %v1106, %v1104
    %v1293 = vpack.c.b16 %v1109, %v1107
    %v1294 = vpack.c.b16 %v1110, %v1108
    %v1295 = vpack.c.b16 %v1113, %v1111
    %v1296 = vpack.c.b16 %v1114, %v1112
    %v1297 = vpack.c.b16 %v1117, %v1115
    %v1298 = vpack.c.b16 %v1118, %v1116
    %v1299 = vpack.c.b16 %v1121, %v1119
    %v1300 = vpack.c.b16 %v1122, %v1120
    %v1301 = vpack.c.b16 %v1125, %v1123
    %v1302 = vpack.c.b16 %v1126, %v1124
    %v1303 = vpack.c.b16 %v1129, %v1127
    %v1304 = vpack.c.b16 %v1130, %v1128
    %v1305 = vpack.c.b16 %v1133, %v1131
    %v1306 = vpack.c.b16 %v1134, %v1132
    %v1307 = vpack.c.b16 %v1137, %v1135
    %v1308 = vpack.c.b16 %v1138, %v1136
    %v1309 = vpack.c.b16 %v1141, %v1139
    %v1310 = vpack.c.b16 %v1142, %v1140
    %v1311 = vpack.c.b16 %v1145, %v1143
    %v1312 = vpack.c.b16 %v1146, %v1144
    %v1313 = vpack.c.b16 %v1149, %v1147
    %v1314 = vpack.c.b16 %v1150, %v1148
    %v1315 = vpack.c.b16 %v1153, %v1151
    %v1316 = vpack.c.b16 %v1154, %v1152
    %v1317 = vpack.c.b16 %v1157, %v1155
    %v1318 = vpack.c.b16 %v1158, %v1156
    %v1319 = vpack.c.b16 %v1161, %v1159
    %v1320 = vpack.c.b16 %v1162, %v1160
    %v1321 = vpack.c.b16 %v1165, %v1163
    %v1322 = vpack.c.b16 %v1166, %v1164
    %v1323 = vpack.c.b16 %v1169, %v1167
    %v1324 = vpack.c.b16 %v1170, %v1168
    %v1325 = vpack.c.b16 %v1173, %v1171
    %v1326 = vpack.c.b16 %v1174, %v1172
    %v1327 = vpack.c.b16 %v1177, %v1175
    %v1328 = vpack.c.b16 %v1178, %v1176
    %v1329 = vpack.c.b16 %v1181, %v1179
    %v1330 = vpack.c.b16 %v1182, %v1180
    %v1331 = vpack.c.b16 %v1185, %v1183
    %v1332 = vpack.c.b16 %v1186, %v1184
    %v1333 = vpack.c.b16 %v1189, %v1187
    %v1334 = vpack.c.b16 %v1190, %v1188
    %v1335 = vpack.c.b16 %v1193, %v1191
    %v1336 = vpack.c.b16 %v1194, %v1192
    %v1337 = vpack.c.b16 %v1197, %v1195
    %v1338 = vpack.c.b16 %v1198, %v1196
    %v1339 = vpack.c.b16 %v1201, %v1199
    %v1340 = vpack.c.b16 %v1202, %v1200
    %v1341 = vpack.c.b16 %v1205, %v1203
    %v1342 = vpack.c.b16 %v1206, %v1204
    %v1343 = vpack.c.b16 %v1209, %v1207
    %v1344 = vpack.c.b16 %v1210, %v1208
    %v1345 = vpack.c.b16 %v1213, %v1211
    %v1346 = vpack.c.b16 %v1214, %v1212
    %v1347 = vpack.c.b16 %v1217, %v1215
    %v1348 = vpack.c.b16 %v1218, %v1216
    %v1349 = vpack.c.b16 %v1221, %v1219
    %v1350 = vpack.c.b16 %v1222, %v1220
    %1479 = vmatprep.subr.bf16.mxu0 %v1238
    %1480 = vmatpush1.bf16.msra.mxu0 %v1237
    %1481 = vmatprep.subr.bf16.mxu0 %v1236
    %1482 = vmatpush1.bf16.msra.mxu0 %v1235
    %1483 = vmatprep.subr.bf16.mxu0 %v1234
    %1484 = vmatpush1.bf16.msra.mxu0 %v1233
    %1485 = vmatprep.subr.bf16.mxu0 %v1232
    %1486 = vmatpush1.bf16.msra.mxu0 %v1231
    %1487 = vmatprep.subr.bf16.mxu0 %v1230
    %1488 = vmatpush1.bf16.msra.mxu0 %v1229
    %1489 = vmatprep.subr.bf16.mxu0 %v1228
    %1490 = vmatpush1.bf16.msra.mxu0 %v1227
    %1491 = vmatprep.subr.bf16.mxu0 %v1226
    %1492 = vmatpush1.bf16.msra.mxu0 %v1225
    %1493 = vmatprep.subr.bf16.mxu0 %v1224
    %1494 = vmatpush1.bf16.msra.mxu0 %v1223
    %1495 = vmatprep.subr.bf16.mxu0 %v1254
    %1496 = vmatpush2.bf16.msra.mxu0 %v1253
    %1497 = vmatprep.subr.bf16.mxu0 %v1252
    %1498 = vmatpush2.bf16.msra.mxu0 %v1251
    %1499 = vmatprep.subr.bf16.mxu0 %v1250
    %1500 = vmatpush2.bf16.msra.mxu0 %v1249
    %1501 = vmatprep.subr.bf16.mxu0 %v1248
    %1502 = vmatpush2.bf16.msra.mxu0 %v1247
    %1503 = vmatprep.subr.bf16.mxu0 %v1246
    %1504 = vmatpush2.bf16.msra.mxu0 %v1245
    %1505 = vmatprep.subr.bf16.mxu0 %v1244
    %1506 = vmatpush2.bf16.msra.mxu0 %v1243
    %1507 = vmatprep.subr.bf16.mxu0 %v1242
    %1508 = vmatpush2.bf16.msra.mxu0 %v1241
    %1509 = vmatprep.subr.bf16.mxu0 %v1240
    %1510 = vmatpush2.bf16.msra.mxu0 %v1239
    %1511 = vmatprep.mubr.bf16.mxu0 %v692
    %1512 = vmatmul.mubr.bf16.gmra.mxu0 %v691
    %v1513 = vpop.f32.mrf.mxu0
    %v1514 = vadd.f32 %v832, %v1513
    %v1515 = vpop.f32.mrf.mxu0
    %v1516 = vadd.f32 %v836, %v1515
    %v1517 = vpop.f32.mrf.mxu0
    %v1518 = vpop.f32.mrf.mxu0
    %1519 = vdwg.mxu0
    %1520 = vmatprep.subr.bf16.mxu0 %v1270
    %1521 = vmatpush1.bf16.msra.mxu0 %v1269
    %1522 = vmatprep.subr.bf16.mxu0 %v1268
    %1523 = vmatpush1.bf16.msra.mxu0 %v1267
    %1524 = vmatprep.subr.bf16.mxu0 %v1266
    %1525 = vmatpush1.bf16.msra.mxu0 %v1265
    %1526 = vmatprep.subr.bf16.mxu0 %v1264
    %1527 = vmatpush1.bf16.msra.mxu0 %v1263
    %1528 = vmatprep.subr.bf16.mxu0 %v1262
    %1529 = vmatpush1.bf16.msra.mxu0 %v1261
    %1530 = vmatprep.subr.bf16.mxu0 %v1260
    %1531 = vmatpush1.bf16.msra.mxu0 %v1259
    %1532 = vmatprep.subr.bf16.mxu0 %v1258
    %1533 = vmatpush1.bf16.msra.mxu0 %v1257
    %1534 = vmatprep.subr.bf16.mxu0 %v1256
    %1535 = vmatpush1.bf16.msra.mxu0 %v1255
    %1536 = vmatprep.subr.bf16.mxu0 %v1286
    %1537 = vmatpush2.bf16.msra.mxu0 %v1285
    %1538 = vmatprep.subr.bf16.mxu0 %v1284
    %1539 = vmatpush2.bf16.msra.mxu0 %v1283
    %1540 = vmatprep.subr.bf16.mxu0 %v1282
    %1541 = vmatpush2.bf16.msra.mxu0 %v1281
    %1542 = vmatprep.subr.bf16.mxu0 %v1280
    %1543 = vmatpush2.bf16.msra.mxu0 %v1279
    %1544 = vmatprep.subr.bf16.mxu0 %v1278
    %1545 = vmatpush2.bf16.msra.mxu0 %v1277
    %1546 = vmatprep.subr.bf16.mxu0 %v1276
    %1547 = vmatpush2.bf16.msra.mxu0 %v1275
    %1548 = vmatprep.subr.bf16.mxu0 %v1274
    %1549 = vmatpush2.bf16.msra.mxu0 %v1273
    %1550 = vmatprep.subr.bf16.mxu0 %v1272
    %1551 = vmatpush2.bf16.msra.mxu0 %v1271
    %1552 = vmatprep.mubr.bf16.mxu0 %v694
    %1553 = vmatmul.mubr.bf16.gmra.mxu0 %v693
    %v1554 = vpop.f32.mrf.mxu0
    %v1555 = vadd.f32 %v1514, %v1554
    %v1556 = vpop.f32.mrf.mxu0
    %v1557 = vadd.f32 %v1516, %v1556
    %v1558 = vpop.f32.mrf.mxu0
    %v1559 = vpop.f32.mrf.mxu0
    %1560 = vdwg.mxu0
    %1561 = vmatprep.subr.bf16.mxu0 %v1302
    %1562 = vmatpush1.bf16.msra.mxu0 %v1301
    %1563 = vmatprep.subr.bf16.mxu0 %v1300
    %1564 = vmatpush1.bf16.msra.mxu0 %v1299
    %1565 = vmatprep.subr.bf16.mxu0 %v1298
    %1566 = vmatpush1.bf16.msra.mxu0 %v1297
    %1567 = vmatprep.subr.bf16.mxu0 %v1296
    %1568 = vmatpush1.bf16.msra.mxu0 %v1295
    %1569 = vmatprep.subr.bf16.mxu0 %v1294
    %1570 = vmatpush1.bf16.msra.mxu0 %v1293
    %1571 = vmatprep.subr.bf16.mxu0 %v1292
    %1572 = vmatpush1.bf16.msra.mxu0 %v1291
    %1573 = vmatprep.subr.bf16.mxu0 %v1290
    %1574 = vmatpush1.bf16.msra.mxu0 %v1289
    %1575 = vmatprep.subr.bf16.mxu0 %v1288
    %1576 = vmatpush1.bf16.msra.mxu0 %v1287
    %1577 = vmatprep.subr.bf16.mxu0 %v1318
    %1578 = vmatpush2.bf16.msra.mxu0 %v1317
    %1579 = vmatprep.subr.bf16.mxu0 %v1316
    %1580 = vmatpush2.bf16.msra.mxu0 %v1315
    %1581 = vmatprep.subr.bf16.mxu0 %v1314
    %1582 = vmatpush2.bf16.msra.mxu0 %v1313
    %1583 = vmatprep.subr.bf16.mxu0 %v1312
    %1584 = vmatpush2.bf16.msra.mxu0 %v1311
    %1585 = vmatprep.subr.bf16.mxu0 %v1310
    %1586 = vmatpush2.bf16.msra.mxu0 %v1309
    %1587 = vmatprep.subr.bf16.mxu0 %v1308
    %1588 = vmatpush2.bf16.msra.mxu0 %v1307
    %1589 = vmatprep.subr.bf16.mxu0 %v1306
    %1590 = vmatpush2.bf16.msra.mxu0 %v1305
    %1591 = vmatprep.subr.bf16.mxu0 %v1304
    %1592 = vmatpush2.bf16.msra.mxu0 %v1303
    %1593 = vmatprep.mubr.bf16.mxu0 %v696
    %1594 = vmatmul.mubr.bf16.gmra.mxu0 %v695
    %v1595 = vpop.f32.mrf.mxu0
    %v1596 = vadd.f32 %v1555, %v1595
    %v1597 = vpop.f32.mrf.mxu0
    %v1598 = vadd.f32 %v1557, %v1597
    %v1599 = vpop.f32.mrf.mxu0
    %v1600 = vpop.f32.mrf.mxu0
    %1601 = vdwg.mxu0
    %1602 = vmatprep.subr.bf16.mxu0 %v1334
    %1603 = vmatpush1.bf16.msra.mxu0 %v1333
    %1604 = vmatprep.subr.bf16.mxu0 %v1332
    %1605 = vmatpush1.bf16.msra.mxu0 %v1331
    %1606 = vmatprep.subr.bf16.mxu0 %v1330
    %1607 = vmatpush1.bf16.msra.mxu0 %v1329
    %1608 = vmatprep.subr.bf16.mxu0 %v1328
    %1609 = vmatpush1.bf16.msra.mxu0 %v1327
    %1610 = vmatprep.subr.bf16.mxu0 %v1326
    %1611 = vmatpush1.bf16.msra.mxu0 %v1325
    %1612 = vmatprep.subr.bf16.mxu0 %v1324
    %1613 = vmatpush1.bf16.msra.mxu0 %v1323
    %1614 = vmatprep.subr.bf16.mxu0 %v1322
    %1615 = vmatpush1.bf16.msra.mxu0 %v1321
    %1616 = vmatprep.subr.bf16.mxu0 %v1320
    %1617 = vmatpush1.bf16.msra.mxu0 %v1319
    %1618 = vmatprep.subr.bf16.mxu0 %v1350
    %1619 = vmatpush2.bf16.msra.mxu0 %v1349
    %1620 = vmatprep.subr.bf16.mxu0 %v1348
    %1621 = vmatpush2.bf16.msra.mxu0 %v1347
    %1622 = vmatprep.subr.bf16.mxu0 %v1346
    %1623 = vmatpush2.bf16.msra.mxu0 %v1345
    %1624 = vmatprep.subr.bf16.mxu0 %v1344
    %1625 = vmatpush2.bf16.msra.mxu0 %v1343
    %1626 = vmatprep.subr.bf16.mxu0 %v1342
    %1627 = vmatpush2.bf16.msra.mxu0 %v1341
    %1628 = vmatprep.subr.bf16.mxu0 %v1340
    %1629 = vmatpush2.bf16.msra.mxu0 %v1339
    %1630 = vmatprep.subr.bf16.mxu0 %v1338
    %1631 = vmatpush2.bf16.msra.mxu0 %v1337
    %1632 = vmatprep.subr.bf16.mxu0 %v1336
    %1633 = vmatpush2.bf16.msra.mxu0 %v1335
    %1634 = vmatprep.mubr.bf16.mxu0 %v698
    %1635 = vmatmul.mubr.bf16.gmra.mxu0 %v697
    %v1636 = vpop.f32.mrf.mxu0
    %v1637 = vadd.f32 %v1596, %v1636
    %v1638 = vpop.f32.mrf.mxu0
    %v1639 = vadd.f32 %v1598, %v1638
    %v1640 = vpop.f32.mrf.mxu0
    %v1641 = vpop.f32.mrf.mxu0
    %1642 = vdwg.mxu0
    %v1643 = vmax.f32 %v1637, 0.0
    %v1644 = vmax.f32 %v1639, 0.0
    %v1645 = vpack.c.bf16 %v1643, %v1643
    %v1646 = vpack.c.bf16 %v1644, %v1644
    %v1647 = vld [vmem:[#allocation10] sm:$0xf]
    %v1648 = vld [vmem:[#allocation10 + $0x4] sm:$0xf]
    %v1649 = vld [vmem:[#allocation10 + $0x8] sm:$0xf]
    %v1650 = vld [vmem:[#allocation10 + $0xc] sm:$0xf]
    %v1651 = vld [vmem:[#allocation10 + $0x10] sm:$0xf]
    %v1652 = vld [vmem:[#allocation10 + $0x14] sm:$0xf]
    %v1653 = vld [vmem:[#allocation10 + $0x18] sm:$0xf]
    %v1654 = vld [vmem:[#allocation10 + $0x1c] sm:$0xf]
    %v1655 = vld [vmem:[#allocation10 + $0x20] sm:$0xf]
    %v1656 = vld [vmem:[#allocation10 + $0x24] sm:$0xf]
    %v1657 = vld [vmem:[#allocation10 + $0x28] sm:$0xf]
    %v1658 = vld [vmem:[#allocation10 + $0x2c] sm:$0xf]
    %v1659 = vld [vmem:[#allocation10 + $0x30] sm:$0xf]
    %v1660 = vld [vmem:[#allocation10 + $0x34] sm:$0xf]
    %v1661 = vld [vmem:[#allocation10 + $0x38] sm:$0xf]
    %v1662 = vld [vmem:[#allocation10 + $0x3c] sm:$0xf]
    %v1663 = vld [vmem:[#allocation10 + $0x40] sm:$0xf]
    %v1664 = vld [vmem:[#allocation10 + $0x44] sm:$0xf]
    %v1665 = vld [vmem:[#allocation10 + $0x48] sm:$0xf]
    %v1666 = vld [vmem:[#allocation10 + $0x4c] sm:$0xf]
    %v1667 = vld [vmem:[#allocation10 + $0x50] sm:$0xf]
    %v1668 = vld [vmem:[#allocation10 + $0x54] sm:$0xf]
    %v1669 = vld [vmem:[#allocation10 + $0x58] sm:$0xf]
    %v1670 = vld [vmem:[#allocation10 + $0x5c] sm:$0xf]
    %v1671 = vld [vmem:[#allocation10 + $0x60] sm:$0xf]
    %v1672 = vld [vmem:[#allocation10 + $0x64] sm:$0xf]
    %v1673 = vld [vmem:[#allocation10 + $0x68] sm:$0xf]
    %v1674 = vld [vmem:[#allocation10 + $0x6c] sm:$0xf]
    %v1675 = vld [vmem:[#allocation10 + $0x70] sm:$0xf]
    %v1676 = vld [vmem:[#allocation10 + $0x74] sm:$0xf]
    %v1677 = vld [vmem:[#allocation10 + $0x78] sm:$0xf]
    %v1678 = vld [vmem:[#allocation10 + $0x7c] sm:$0xf]
    %v1679 = vld [vmem:[%s6] sm:$0x1]
    %v1681 = vlaneseq
    %v1682 = vshrl.u32 %v1681, 7
    %v1683 = vsub.s32 0, %v1682
    %v1684 = vrot.slane %v1679, %v1683
    %v1718 = vunpack.c.l.b16 %v1647
    %v1719 = vunpack.c.l.b16 %v1648
    %v1720 = vunpack.c.l.b16 %v1649
    %v1721 = vunpack.c.l.b16 %v1650
    %v1722 = vunpack.c.l.b16 %v1651
    %v1723 = vunpack.c.l.b16 %v1652
    %v1724 = vunpack.c.l.b16 %v1653
    %v1725 = vunpack.c.l.b16 %v1654
    %v1726 = vunpack.c.l.b16 %v1655
    %v1727 = vunpack.c.l.b16 %v1656
    %v1728 = vunpack.c.l.b16 %v1657
    %v1729 = vunpack.c.l.b16 %v1658
    %v1730 = vunpack.c.l.b16 %v1659
    %v1731 = vunpack.c.l.b16 %v1660
    %v1732 = vunpack.c.l.b16 %v1661
    %v1733 = vunpack.c.l.b16 %v1662
    %v1734 = vunpack.c.l.b16 %v1663
    %v1735 = vunpack.c.l.b16 %v1664
    %v1736 = vunpack.c.l.b16 %v1665
    %v1737 = vunpack.c.l.b16 %v1666
    %v1738 = vunpack.c.l.b16 %v1667
    %v1739 = vunpack.c.l.b16 %v1668
    %v1740 = vunpack.c.l.b16 %v1669
    %v1741 = vunpack.c.l.b16 %v1670
    %v1742 = vunpack.c.l.b16 %v1671
    %v1743 = vunpack.c.l.b16 %v1672
    %v1744 = vunpack.c.l.b16 %v1673
    %v1745 = vunpack.c.l.b16 %v1674
    %v1746 = vunpack.c.l.b16 %v1675
    %v1747 = vunpack.c.l.b16 %v1676
    %v1748 = vunpack.c.l.b16 %v1677
    %v1749 = vunpack.c.l.b16 %v1678
    %v1750 = vpack.c.b16 %v1719, %v1718
    %v1751 = vpack.c.b16 %v1721, %v1720
    %v1752 = vpack.c.b16 %v1723, %v1722
    %v1753 = vpack.c.b16 %v1725, %v1724
    %v1754 = vpack.c.b16 %v1727, %v1726
    %v1755 = vpack.c.b16 %v1729, %v1728
    %v1756 = vpack.c.b16 %v1731, %v1730
    %v1757 = vpack.c.b16 %v1733, %v1732
    %v1758 = vpack.c.b16 %v1735, %v1734
    %v1759 = vpack.c.b16 %v1737, %v1736
    %v1760 = vpack.c.b16 %v1739, %v1738
    %v1761 = vpack.c.b16 %v1741, %v1740
    %v1762 = vpack.c.b16 %v1743, %v1742
    %v1763 = vpack.c.b16 %v1745, %v1744
    %v1764 = vpack.c.b16 %v1747, %v1746
    %v1765 = vpack.c.b16 %v1749, %v1748
    %1782 = vmatprep.subr.bf16.mxu0 0
    %1783 = vmatpush1.bf16.msra.mxu0 %v1757
    %1784 = vmatprep.subr.bf16.mxu0 0
    %1785 = vmatpush1.bf16.msra.mxu0 %v1756
    %1786 = vmatprep.subr.bf16.mxu0 0
    %1787 = vmatpush1.bf16.msra.mxu0 %v1755
    %1788 = vmatprep.subr.bf16.mxu0 0
    %1789 = vmatpush1.bf16.msra.mxu0 %v1754
    %1790 = vmatprep.subr.bf16.mxu0 0
    %1791 = vmatpush1.bf16.msra.mxu0 %v1753
    %1792 = vmatprep.subr.bf16.mxu0 0
    %1793 = vmatpush1.bf16.msra.mxu0 %v1752
    %1794 = vmatprep.subr.bf16.mxu0 0
    %1795 = vmatpush1.bf16.msra.mxu0 %v1751
    %1796 = vmatprep.subr.bf16.mxu0 0
    %1797 = vmatpush1.bf16.msra.mxu0 %v1750
    %1798 = vmatprep.subr.bf16.mxu0 0
    %1799 = vmatpush2.bf16.msra.mxu0 %v1765
    %1800 = vmatprep.subr.bf16.mxu0 0
    %1801 = vmatpush2.bf16.msra.mxu0 %v1764
    %1802 = vmatprep.subr.bf16.mxu0 0
    %1803 = vmatpush2.bf16.msra.mxu0 %v1763
    %1804 = vmatprep.subr.bf16.mxu0 0
    %1805 = vmatpush2.bf16.msra.mxu0 %v1762
    %1806 = vmatprep.subr.bf16.mxu0 0
    %1807 = vmatpush2.bf16.msra.mxu0 %v1761
    %1808 = vmatprep.subr.bf16.mxu0 0
    %1809 = vmatpush2.bf16.msra.mxu0 %v1760
    %1810 = vmatprep.subr.bf16.mxu0 0
    %1811 = vmatpush2.bf16.msra.mxu0 %v1759
    %1812 = vmatprep.subr.bf16.mxu0 0
    %1813 = vmatpush2.bf16.msra.mxu0 %v1758
    %1814 = vmatprep.mubr.bf16.mxu0 %v1646
    %1815 = vmatmul.mubr.bf16.gmra.mxu0 %v1645
    %v1816 = vpop.f32.mrf.mxu0
    %v1817 = vadd.f32 %v1684, %v1816
    %v1818 = vpop.f32.mrf.mxu0
    %v1819 = vpop.f32.mrf.mxu0
    %v1820 = vpop.f32.mrf.mxu0
    %1821 = vdwg.mxu0
    %1822 = vst [vmem:[#allocation11] sm:$0xff] %v1817
    // Predicated region
    $region50: #{tpu_custom_call.1} parent=1 // pred_check
      _
    $region51: #{tpu_custom_call.1} parent=1 // pred_check_branch
      %1824 = sbr.rel (0) target = $region53
    $region52: #{tpu_custom_call.1} parent=1 // pred_region
      %s1826 = ssub.s32 128, 128
      %1827 = vsyncadd [#allocation4], %s1826
      %s1829 = sshll.u32 [#allocation11], 4
      %s1830 = int_to_ptr.vmem [resolvable:$true] %s1829
      %1832 = dma.vmem_to_hbm [thread:$0]  %s1830, 128, %s7, [#allocation4]
    $region53: #{tpu_custom_call.1} parent=1 // pred_fallthru
      _
    // Predicated region
    $region54: #{tpu_custom_call.1} parent=1 // pred_check
      _
    $region55: #{tpu_custom_call.1} parent=1 // pred_check_branch
      %1834 = sbr.rel (0) target = $region57
    $region56: #{tpu_custom_call.1} parent=1 // pred_region
      %1835 = dma.done [#allocation4], 128
    $region57: #{tpu_custom_call.1} parent=1 // pred_fallthru
      _
    %1836 = vsyncpa [#allocation3], 1
    %1837 = vsyncpa [#allocation6], 1
    %1838 = vsyncpa [#allocation9], 1
    %1839 = vsyncpa [#allocation4], 1

</llo_original>
